<compile_context>
chip_gen: v5e
topology: v5e:2x2
jax: 0.10.0
libtpu: 0.0.40
codegen_flags: <defaults>
</compile_context>

<pallas_src>
import math

import jax
import jax.numpy as jnp
from jax import lax
from jax.experimental import pallas as pl
from jax.experimental.pallas import tpu as pltpu


def _flash_sdpa_kernel(q_ref, k_ref, v_ref, o_ref, m_ref, l_ref, acc_ref):
    # q_ref : (1, group, tq, D)  -- one whole GQA group of query heads
    # k_ref : (1, 1, tk, D)      -- the shared kv head, one Sk tile
    # v_ref : (1, 1, tk, D)
    # o_ref : (1, group, tq, D)
    # m_ref/l_ref : (group*tq, 1) f32 scratch, acc_ref : (group*tq, D) f32 scratch
    kv_idx = pl.program_id(3)

    @pl.when(kv_idx == 0)
    def _init():
        m_ref[...] = jnp.full_like(m_ref, -jnp.inf)
        l_ref[...] = jnp.zeros_like(l_ref)
        acc_ref[...] = jnp.zeros_like(acc_ref)

    _, group, tq, D = q_ref.shape
    scale = 1.0 / math.sqrt(D)

    # Fatten the MXU M dimension: (group, tq, D) -> (group*tq, D).  Keep the
    # native input dtype (bf16 stays bf16) and fold the 1/sqrt(D) scale into q
    # (Sq*D elements of VPU work instead of Sq*Sk).
    q = q_ref[0].reshape(group * tq, D) * scale
    k = k_ref[0, 0]  # (tk, D)
    v = v_ref[0, 0]  # (tk, D)

    # Scores: contract D against D directly (no explicit k.T), f32 accumulation.
    s = lax.dot_general(
        q, k,
        dimension_numbers=(((1,), (1,)), ((), ())),
        preferred_element_type=jnp.float32,
    )  # (group*tq, tk)

    # Online (flash) softmax update.
    m_prev = m_ref[...]
    m_new = jnp.maximum(m_prev, jnp.max(s, axis=-1, keepdims=True))
    alpha = jnp.exp(m_prev - m_new)
    p = jnp.exp(s - m_new)  # f32 (group*tq, tk)

    l_ref[...] = alpha * l_ref[...] + jnp.sum(p, axis=-1, keepdims=True)
    pv = lax.dot_general(
        p.astype(v.dtype), v,
        dimension_numbers=(((1,), (0,)), ((), ())),
        preferred_element_type=jnp.float32,
    )  # (group*tq, D)
    acc_ref[...] = alpha * acc_ref[...] + pv
    m_ref[...] = m_new

    @pl.when(kv_idx == pl.num_programs(3) - 1)
    def _finalize():
        inv_l = pl.reciprocal(l_ref[...], approx=True)  # EUP slot, ~free
        out = acc_ref[...] * inv_l
        o_ref[0] = out.reshape(group, tq, D).astype(o_ref.dtype)


def sdpa_gqa(query, key, value, *, tq=None, tk=None,
             vmem_limit_bytes=64 * 1024 * 1024):
    """Pallas TPU flash attention with GQA head broadcasting (enable_gqa=True)."""
    B, Hq, Sq, D = query.shape
    Bk, Hkv, Sk, Dk = key.shape
    assert B == Bk and D == Dk and value.shape == key.shape
    assert Hq % Hkv == 0, "enable_gqa requires Hq to be a multiple of Hkv"
    group = Hq // Hkv

    # Tile sizes: largest MXU-friendly tiles that comfortably fit VMEM on
    # v5e/v6e/v7x for these head dims.  (For D < 128, a lane-dense output
    # reshape to (tq, group*D) would avoid masked stores; not needed at D=128.)
    if tq is None:
        tq = min(Sq, 128)
    if tk is None:
        tk = min(Sk, 128)
    assert Sq % tq == 0 and Sk % tk == 0, "Sq/Sk must be divisible by tile sizes"

    # Grid: (batch, kv-head, Sq-block, Sk-block).  The Sk axis is the online-
    # softmax reduction -> last axis, 'arbitrary'.  One grid step processes a
    # whole GQA group against one K/V tile, so K/V are DMA'd once per group.
    grid = (B, Hkv, Sq // tq, Sk // tk)

    q_spec = pl.BlockSpec((1, group, tq, D), lambda b, h, i, k: (b, h, i, 0))
    kv_spec = pl.BlockSpec((1, 1, tk, D), lambda b, h, i, k: (b, h, k, 0))
    o_spec = pl.BlockSpec((1, group, tq, D), lambda b, h, i, k: (b, h, i, 0))

    return pl.pallas_call(
        _flash_sdpa_kernel,
        out_shape=jax.ShapeDtypeStruct((B, Hq, Sq, D), query.dtype),
        grid_spec=pltpu.PrefetchScalarGridSpec(
            num_scalar_prefetch=0,
            grid=grid,
            in_specs=[q_spec, kv_spec, kv_spec],
            out_specs=o_spec,
            scratch_shapes=[
                pltpu.VMEM((group * tq, 1), jnp.float32),  # running max m
                pltpu.VMEM((group * tq, 1), jnp.float32),  # running sum l
                pltpu.VMEM((group * tq, D), jnp.float32),  # output accumulator
            ],
        ),
        compiler_params=pltpu.CompilerParams(
            dimension_semantics=("parallel", "parallel", "parallel", "arbitrary"),
            vmem_limit_bytes=vmem_limit_bytes,
        ),
    )(query, key, value)


def _sdpa_reference(query, key, value):
    B, Hq, Sq, D = query.shape
    Hkv = key.shape[1]
    group = Hq // Hkv
    q = query.astype(jnp.float32)
    k = jnp.repeat(key, group, axis=1).astype(jnp.float32)
    v = jnp.repeat(value, group, axis=1).astype(jnp.float32)
    s = jnp.einsum("bhqd,bhkd->bhqk", q, k) / math.sqrt(D)
    p = jax.nn.softmax(s, axis=-1)
    return jnp.einsum("bhqk,bhkd->bhqd", p, v).astype(query.dtype)


if __name__ == "__main__":
    # Small but tiling-exercising shapes: grid = (2, 2, 2, 2) with tq=tk=128,
    # so the online-softmax accumulation across Sk blocks is actually used.
    B, Hq, Hkv, Sq, Sk, D = 2, 4, 2, 256, 256, 128

    key0 = jax.random.PRNGKey(0)
    kq, kk, kv = jax.random.split(key0, 3)
    query = jax.random.normal(kq, (B, Hq, Sq, D), dtype=jnp.float32)
    key_t = jax.random.normal(kk, (B, Hkv, Sk, D), dtype=jnp.float32)
    value = jax.random.normal(kv, (B, Hkv, Sk, D), dtype=jnp.float32)

    out = sdpa_gqa(query, key_t, value)
    out = jax.block_until_ready(out)

    ref = _sdpa_reference(query, key_t, value)
    assert out.shape == (B, Hq, Sq, D)
    max_err = jnp.max(jnp.abs(out - ref))
    # approx reciprocal in the finalize step -> allow ~1e-3-level error.
    assert jnp.allclose(out, ref, atol=2e-3, rtol=2e-3), f"max abs err {max_err}"

    print("KERNEL_OK")
</pallas_src>

<mosaic_0001>
module attributes {stable_mosaic.version = 11 : i64} {
  func.func @_flash_sdpa_kernel(%arg0: i32, %arg1: i32, %arg2: i32, %arg3: i32, %arg4: memref<1x2x128x128xf32, #tpu.memory_space<vmem>>, %arg5: memref<1x1x128x128xf32, #tpu.memory_space<vmem>>, %arg6: memref<1x1x128x128xf32, #tpu.memory_space<vmem>>, %arg7: memref<1x2x128x128xf32, #tpu.memory_space<vmem>>, %arg8: memref<256x1xf32, #tpu.memory_space<vmem>>, %arg9: memref<256x1xf32, #tpu.memory_space<vmem>>, %arg10: memref<256x128xf32, #tpu.memory_space<vmem>>) attributes {dimension_semantics = [#tpu.dimension_semantics<parallel>, #tpu.dimension_semantics<parallel>, #tpu.dimension_semantics<parallel>, #tpu.dimension_semantics<arbitrary>], iteration_bounds = array<i64: 2, 2, 2, 2>, scalar_prefetch = 0 : i64, scratch_operands = 3 : i64, tpu.core_type = #tpu.core_type<tc>, window_params = [{transform_indices = @transform_0, window_bounds = array<i64: 1, 2, 128, 128>}, {transform_indices = @transform_1, window_bounds = array<i64: 1, 1, 128, 128>}, {transform_indices = @transform_2, window_bounds = array<i64: 1, 1, 128, 128>}, {transform_indices = @transform_3, window_bounds = array<i64: 1, 2, 128, 128>}]} {
    %c0_i32 = arith.constant 0 : i32
    %0 = arith.cmpi eq, %arg3, %c0_i32 : i32
    %1 = arith.extui %0 : i1 to i32
    %c0_i32_0 = arith.constant 0 : i32
    %2 = arith.cmpi ne, %1, %c0_i32_0 : i32
    scf.if %2 {
      %cst_29 = arith.constant 0xFF800000 : f32
      %38 = vector.broadcast %cst_29 : f32 to vector<256x1xf32>
      %c0_30 = arith.constant 0 : index
      %c0_31 = arith.constant 0 : index
      %39 = vector.load %arg8[%c0_30, %c0_31] : memref<256x1xf32, #tpu.memory_space<vmem>>, vector<256x1xf32>
      tpu.vector_store %arg8[%c0_30, %c0_31], %38 {strides = array<i32>} : memref<256x1xf32, #tpu.memory_space<vmem>>, vector<256x1xf32>,
      %cst_32 = arith.constant 0.000000e+00 : f32
      %40 = vector.broadcast %cst_32 : f32 to vector<256x1xf32>
      %c0_33 = arith.constant 0 : index
      %c0_34 = arith.constant 0 : index
      %41 = vector.load %arg9[%c0_33, %c0_34] : memref<256x1xf32, #tpu.memory_space<vmem>>, vector<256x1xf32>
      tpu.vector_store %arg9[%c0_33, %c0_34], %40 {strides = array<i32>} : memref<256x1xf32, #tpu.memory_space<vmem>>, vector<256x1xf32>,
      %cst_35 = arith.constant 0.000000e+00 : f32
      %42 = vector.broadcast %cst_35 : f32 to vector<256x128xf32>
      %c0_36 = arith.constant 0 : index
      %c0_37 = arith.constant 0 : index
      %43 = vector.load %arg10[%c0_36, %c0_37] : memref<256x128xf32, #tpu.memory_space<vmem>>, vector<256x128xf32>
      tpu.vector_store %arg10[%c0_36, %c0_37], %42 {strides = array<i32>} : memref<256x128xf32, #tpu.memory_space<vmem>>, vector<256x128xf32>,
    } else {
    }
    %c0 = arith.constant 0 : index
    %c0_1 = arith.constant 0 : index
    %c0_2 = arith.constant 0 : index
    %c0_3 = arith.constant 0 : index
    %3 = vector.load %arg4[%c0, %c0_1, %c0_2, %c0_3] : memref<1x2x128x128xf32, #tpu.memory_space<vmem>>, vector<1x2x128x128xf32>
    %4 = vector.shape_cast %3 : vector<1x2x128x128xf32> to vector<2x128x128xf32>
    %5 = vector.shape_cast %4 : vector<2x128x128xf32> to vector<256x128xf32>
    %cst = arith.constant 0.0883883461 : f32
    %6 = vector.broadcast %cst : f32 to vector<256x128xf32>
    %7 = arith.mulf %5, %6 : vector<256x128xf32>
    %c0_4 = arith.constant 0 : index
    %c0_5 = arith.constant 0 : index
    %c0_6 = arith.constant 0 : index
    %c0_7 = arith.constant 0 : index
    %8 = vector.load %arg5[%c0_4, %c0_5, %c0_6, %c0_7] : memref<1x1x128x128xf32, #tpu.memory_space<vmem>>, vector<1x1x128x128xf32>
    %9 = vector.shape_cast %8 : vector<1x1x128x128xf32> to vector<128x128xf32>
    %c0_8 = arith.constant 0 : index
    %c0_9 = arith.constant 0 : index
    %c0_10 = arith.constant 0 : index
    %c0_11 = arith.constant 0 : index
    %10 = vector.load %arg6[%c0_8, %c0_9, %c0_10, %c0_11] : memref<1x1x128x128xf32, #tpu.memory_space<vmem>>, vector<1x1x128x128xf32>
    %11 = vector.shape_cast %10 : vector<1x1x128x128xf32> to vector<128x128xf32>
    %cst_12 = arith.constant dense<0.000000e+00> : vector<256x128xf32>
    %12 = tpu.matmul %7, %9, %cst_12 {dimension_numbers = #tpu.dot_dimension_numbers<[1], [1], [0], [0], [0, 0, 1, 0], [], []>} : vector<256x128xf32>, vector<128x128xf32>, vector<256x128xf32> -> vector<256x128xf32>
    %c0_13 = arith.constant 0 : index
    %c0_14 = arith.constant 0 : index
    %13 = vector.load %arg8[%c0_13, %c0_14] : memref<256x1xf32, #tpu.memory_space<vmem>>, vector<256x1xf32>
    %cst_15 = arith.constant dense<0xFF800000> : vector<256xf32>
    %14 = vector.multi_reduction <maximumf>, %12, %cst_15 [1] : vector<256x128xf32> to vector<256xf32>
    %15 = vector.shape_cast %14 : vector<256xf32> to vector<256x1xf32>
    %16 = arith.maximumf %13, %15 : vector<256x1xf32>
    %17 = arith.subf %13, %16 : vector<256x1xf32>
    %18 = math.exp %17 : vector<256x1xf32>
    %19 = vector.broadcast %16 : vector<256x1xf32> to vector<256x128xf32>
    %20 = arith.subf %12, %19 : vector<256x128xf32>
    %21 = math.exp %20 : vector<256x128xf32>
    %c0_16 = arith.constant 0 : index
    %c0_17 = arith.constant 0 : index
    %22 = vector.load %arg9[%c0_16, %c0_17] : memref<256x1xf32, #tpu.memory_space<vmem>>, vector<256x1xf32>
    %23 = arith.mulf %18, %22 : vector<256x1xf32>
    %cst_18 = arith.constant dense<0.000000e+00> : vector<256xf32>
    %24 = vector.multi_reduction <add>, %21, %cst_18 [1] : vector<256x128xf32> to vector<256xf32>
    %25 = vector.shape_cast %24 : vector<256xf32> to vector<256x1xf32>
    %26 = arith.addf %23, %25 : vector<256x1xf32>
    %c0_19 = arith.constant 0 : index
    %c0_20 = arith.constant 0 : index
    %27 = vector.load %arg9[%c0_19, %c0_20] : memref<256x1xf32, #tpu.memory_space<vmem>>, vector<256x1xf32>
    tpu.vector_store %arg9[%c0_19, %c0_20], %26 {strides = array<i32>} : memref<256x1xf32, #tpu.memory_space<vmem>>, vector<256x1xf32>,
    %cst_21 = arith.constant dense<0.000000e+00> : vector<256x128xf32>
    %28 = tpu.matmul %21, %11, %cst_21 {dimension_numbers = #tpu.dot_dimension_numbers<[1], [0], [0], [1], [0, 0, 1, 1], [], []>} : vector<256x128xf32>, vector<128x128xf32>, vector<256x128xf32> -> vector<256x128xf32>
    %c0_22 = arith.constant 0 : index
    %c0_23 = arith.constant 0 : index
    %29 = vector.load %arg10[%c0_22, %c0_23] : memref<256x128xf32, #tpu.memory_space<vmem>>, vector<256x128xf32>
    %30 = vector.broadcast %18 : vector<256x1xf32> to vector<256x128xf32>
    %31 = arith.mulf %30, %29 : vector<256x128xf32>
    %32 = arith.addf %31, %28 : vector<256x128xf32>
    %c0_24 = arith.constant 0 : index
    %c0_25 = arith.constant 0 : index
    %33 = vector.load %arg10[%c0_24, %c0_25] : memref<256x128xf32, #tpu.memory_space<vmem>>, vector<256x128xf32>
    tpu.vector_store %arg10[%c0_24, %c0_25], %32 {strides = array<i32>} : memref<256x128xf32, #tpu.memory_space<vmem>>, vector<256x128xf32>,
    %c0_26 = arith.constant 0 : index
    %c0_27 = arith.constant 0 : index
    %34 = vector.load %arg8[%c0_26, %c0_27] : memref<256x1xf32, #tpu.memory_space<vmem>>, vector<256x1xf32>
    tpu.vector_store %arg8[%c0_26, %c0_27], %16 {strides = array<i32>} : memref<256x1xf32, #tpu.memory_space<vmem>>, vector<256x1xf32>,
    %c1_i32 = arith.constant 1 : i32
    %35 = arith.cmpi eq, %arg3, %c1_i32 : i32
    %36 = arith.extui %35 : i1 to i32
    %c0_i32_28 = arith.constant 0 : i32
    %37 = arith.cmpi ne, %36, %c0_i32_28 : i32
    scf.if %37 {
      %c0_29 = arith.constant 0 : index
      %c0_30 = arith.constant 0 : index
      %38 = vector.load %arg9[%c0_29, %c0_30] : memref<256x1xf32, #tpu.memory_space<vmem>>, vector<256x1xf32>
      %39 = tpu.reciprocal %38 {approx = true} : vector<256x1xf32> -> vector<256x1xf32>
      %c0_31 = arith.constant 0 : index
      %c0_32 = arith.constant 0 : index
      %40 = vector.load %arg10[%c0_31, %c0_32] : memref<256x128xf32, #tpu.memory_space<vmem>>, vector<256x128xf32>
      %41 = vector.broadcast %39 : vector<256x1xf32> to vector<256x128xf32>
      %42 = arith.mulf %40, %41 : vector<256x128xf32>
      %43 = vector.shape_cast %42 : vector<256x128xf32> to vector<2x128x128xf32>
      %c0_33 = arith.constant 0 : index
      %c0_34 = arith.constant 0 : index
      %c0_35 = arith.constant 0 : index
      %c0_36 = arith.constant 0 : index
      %44 = vector.load %arg7[%c0_33, %c0_34, %c0_35, %c0_36] : memref<1x2x128x128xf32, #tpu.memory_space<vmem>>, vector<1x2x128x128xf32>
      %45 = vector.shape_cast %44 : vector<1x2x128x128xf32> to vector<2x128x128xf32>
      %46 = vector.shape_cast %43 : vector<2x128x128xf32> to vector<1x2x128x128xf32>
      tpu.vector_store %arg7[%c0_33, %c0_34, %c0_35, %c0_36], %46 {strides = array<i32>} : memref<1x2x128x128xf32, #tpu.memory_space<vmem>>, vector<1x2x128x128xf32>,
    } else {
    }
    return
  }
  func.func @transform_0(%arg0: i32, %arg1: i32, %arg2: i32, %arg3: i32) -> (i32, i32, i32, i32) {
    %c0_i32 = arith.constant 0 : i32
    %c0_i32_0 = arith.constant 0 : i32
    return %arg0, %arg1, %arg2, %c0_i32 : i32, i32, i32, i32
  }
  func.func @transform_1(%arg0: i32, %arg1: i32, %arg2: i32, %arg3: i32) -> (i32, i32, i32, i32) {
    %c0_i32 = arith.constant 0 : i32
    %c0_i32_0 = arith.constant 0 : i32
    return %arg0, %arg1, %arg3, %c0_i32 : i32, i32, i32, i32
  }
  func.func @transform_2(%arg0: i32, %arg1: i32, %arg2: i32, %arg3: i32) -> (i32, i32, i32, i32) {
    %c0_i32 = arith.constant 0 : i32
    %c0_i32_0 = arith.constant 0 : i32
    return %arg0, %arg1, %arg3, %c0_i32 : i32, i32, i32, i32
  }
  func.func @transform_3(%arg0: i32, %arg1: i32, %arg2: i32, %arg3: i32) -> (i32, i32, i32, i32) {
    %c0_i32 = arith.constant 0 : i32
    %c0_i32_0 = arith.constant 0 : i32
    return %arg0, %arg1, %arg2, %c0_i32 : i32, i32, i32, i32
  }
}

</mosaic_0001>

<llo_original>
// kernel: tpu_custom_call.1
$region0: #{tpu_custom_call.1}
  #allocation0 [shape = 'u32[]', space=smem, size = 0x4, offset = 0x4, fixed_abs, tag = 'smem constant byte address 0x4 - core index']
  #allocation1 [shape = 'u32[72,128]{1,0:T(1,128)}', space=vmem, size = 0x9000, scoped, tag = 'internal scratch']
  #allocation2 [shape = 'f32[256,1]{1,0:T(8,128)}', space=vmem, size = 0x20000, scoped, tag = 'scratch operand']
  #allocation3 [shape = 'f32[256,1]{1,0:T(8,128)}', space=vmem, size = 0x20000, scoped, tag = 'scratch operand']
  #allocation4 [shape = 'f32[256,128]{1,0:T(8,128)}', space=vmem, size = 0x20000, scoped, tag = 'scratch operand']
  #allocation12 [shape = 's32[]', space=sflag, size = 0x4, offset = 0, fixed_abs, tag = 'sflag constant byte address 0x0 - dummy sync flag']
  #allocation14 [shape = 's32[]', space=sflag, size = 0x4, offset = 0, fixed_abs, tag = 'sflag constant byte address 0x0 - dummy sync flag']
  %s0 = inlined_call_operand.hbm [shape: f32[2,4,256,128], index: 0, kind: input, shape index: {}]
  %s1 = inlined_call_operand.hbm [shape: f32[2,2,256,128], index: 1, kind: input, shape index: {}]
  %s2 = inlined_call_operand.hbm [shape: f32[2,2,256,128], index: 2, kind: input, shape index: {}]
  %s3 = inlined_call_operand.hbm [shape: f32[2,4,256,128], index: 3, kind: output, shape index: {}]
  %s4 = sld [smem:[#allocation0]]
  $region65: #{tpu_custom_call.1} parent=0
    _
  %s6 = ssub.s32 1, %s4
  %s7 = scalar_select 0, %s6, %s4
  $region1: #{tpu_custom_call.1} parent=0
    #allocation5 [shape = 'u8[262144]{0}', space=vmem, size = 0x40000, scoped, tag = 'input window, operand 0']
    #allocation6 [shape = 's32[2]{0}', space=sflag, size = 0x8, scoped, tag = 'scoped memory for tpu_custom_call.1']
    #allocation7 [shape = 's32[2]{0}', space=sflag, size = 0x8, scoped, tag = 'scoped memory for tpu_custom_call.1']
    #allocation8 [shape = 'u8[131072]{0}', space=vmem, size = 0x20000, scoped, tag = 'input window, operand 1']
    #allocation9 [shape = 's32[2]{0}', space=sflag, size = 0x8, scoped, tag = 'scoped memory for tpu_custom_call.1']
    #allocation10 [shape = 'u8[131072]{0}', space=vmem, size = 0x20000, scoped, tag = 'input window, operand 2']
    #allocation11 [shape = 'u8[262144]{0}', space=vmem, size = 0x40000, scoped, tag = 'output window, operand 0']
    %8 = vsyncpa [#allocation6], 0
    %s9 = scalar_lea.sflag [#allocation6], 1
    %10 = vsyncpa %s9, 0
    %11 = vsyncpa [#allocation9], 0
    %s12 = scalar_lea.sflag [#allocation9], 1
    %13 = vsyncpa %s12, 0
    %14 = vsyncpa [#allocation7], 0
    %s15 = scalar_lea.sflag [#allocation7], 1
    %16 = vsyncpa %s15, 0
    loop: start=0, step=1, limit=18
    $region2: #{tpu_custom_call.1} parent=1 // loop_pre_header
      _
    $region3: #{tpu_custom_call.1} parent=1 // loop_header
      %s18 = sphi 0, %s22
      %p19 = scmp.ge.s32.totalorder %s18, 18
      %s25 = sphi 0, %s51
      %s26 = sphi 0, %s47
      %s27 = sphi 0, %s43
      %s28 = sphi 0, %s39
      %s29 = sphi 0, %s25
      %s30 = sphi 0, %s26
      %s31 = sphi 0, %s27
      %s32 = sphi 0, %s28
      %s33 = sphi 0, %s29
      %s34 = sphi 0, %s30
      %s35 = sphi 0, %s31
      %s36 = sphi 0, %s32
      %s58 = sphi 0, %s60
      %s61 = sphi 0, %s58
      %s62 = sphi 0, %s61
      %s78 = sphi 0, %s62
      %s88 = sphi 0, %s90
      %s91 = sphi 0, %s88
      %s92 = sphi 0, %s91
      %s108 = sphi 0, %s92
      %s118 = sphi 0, %s120
      %s121 = sphi 0, %s118
      %s122 = sphi 0, %s121
      %s138 = sphi 0, %s122
      %s148 = sphi 0, %s150
      %s151 = sphi 0, %s148
      %s152 = sphi 0, %s151
      %s168 = sphi 0, %s152
    $region4: #{tpu_custom_call.1} parent=1 // loop_header_branch
      %21 = sbr.rel (%p19) target = $region8
    $region5: #{tpu_custom_call.1} parent=1 // loop_body
      %s23 = ssub.s32 %s18, 1
      %s24 = ssub.s32 %s18, 2
      %s37 = sadd.s32 1, %s28
      %p38 = scmp.ge.s32.totalorder %s37, 2
      %s39 = scalar_select %p38, 0, %s37
      %s40 = sadd.s32 1, %s27
      %s41 = scalar_select %p38, %s40, %s27
      %p42 = scmp.ge.s32.totalorder %s41, 2
      %s43 = scalar_select %p42, 0, %s41
      %s44 = sadd.s32 1, %s26
      %s45 = scalar_select %p42, %s44, %s26
      %p46 = scmp.ge.s32.totalorder %s45, 2
      %s47 = scalar_select %p46, 0, %s45
      %s48 = sadd.s32 1, %s25
      %s49 = scalar_select %p46, %s48, %s25
      %p50 = scmp.ge.s32.totalorder %s49, 2
      %s51 = scalar_select %p50, 0, %s49
      %s52 = ssub.s32 %s25, %s51
      %s53 = ssub.s32 %s26, %s47
      %s54 = sor.u32 %s52, %s53
      %s55 = ssub.s32 %s27, %s43
      %s56 = sor.u32 %s54, %s55
      %p57 = scmp.eq.s32.totalorder %s56, 0
      %s59 = sadd.s32 %s58, 1
      %s60 = scalar_select %p57, %s58, %s59
      %p63 = pneg %p57
      %p64 = scmp.eq.s32.totalorder %s18, 15
      %p65 = por %p63, %p64
      %p66 = scmp.ne.s32.totalorder %s58, %s61
      %p67 = scmp.eq.s32.totalorder %s18, 0
      %p68 = por %p66, %p67
      %p69 = scmp.ne.s32.totalorder %s58, %s61
      %p70 = scmp.eq.s32.totalorder %s23, 15
      %p71 = por %p69, %p70
      %p72 = scmp.ne.s32.totalorder %s61, %s62
      %p73 = scmp.eq.s32.totalorder %s23, 0
      %p74 = por %p72, %p73
      %p75 = scmp.ne.s32.totalorder %s61, %s62
      %p76 = scmp.eq.s32.totalorder %s24, 15
      %p77 = por %p75, %p76
      %p79 = scmp.ne.s32.totalorder %s62, %s78
      %p80 = scmp.eq.s32.totalorder %s24, 0
      %p81 = por %p79, %p80
      %s82 = ssub.s32 %s25, %s51
      %s83 = ssub.s32 %s26, %s47
      %s84 = sor.u32 %s82, %s83
      %s85 = ssub.s32 %s28, %s39
      %s86 = sor.u32 %s84, %s85
      %p87 = scmp.eq.s32.totalorder %s86, 0
      %s89 = sadd.s32 %s88, 1
      %s90 = scalar_select %p87, %s88, %s89
      %p93 = pneg %p87
      %p94 = scmp.eq.s32.totalorder %s18, 15
      %p95 = por %p93, %p94
      %p96 = scmp.ne.s32.totalorder %s88, %s91
      %p97 = scmp.eq.s32.totalorder %s18, 0
      %p98 = por %p96, %p97
      %p99 = scmp.ne.s32.totalorder %s88, %s91
      %p100 = scmp.eq.s32.totalorder %s23, 15
      %p101 = por %p99, %p100
      %p102 = scmp.ne.s32.totalorder %s91, %s92
      %p103 = scmp.eq.s32.totalorder %s23, 0
      %p104 = por %p102, %p103
      %p105 = scmp.ne.s32.totalorder %s91, %s92
      %p106 = scmp.eq.s32.totalorder %s24, 15
      %p107 = por %p105, %p106
      %p109 = scmp.ne.s32.totalorder %s92, %s108
      %p110 = scmp.eq.s32.totalorder %s24, 0
      %p111 = por %p109, %p110
      %s112 = ssub.s32 %s25, %s51
      %s113 = ssub.s32 %s26, %s47
      %s114 = sor.u32 %s112, %s113
      %s115 = ssub.s32 %s28, %s39
      %s116 = sor.u32 %s114, %s115
      %p117 = scmp.eq.s32.totalorder %s116, 0
      %s119 = sadd.s32 %s118, 1
      %s120 = scalar_select %p117, %s118, %s119
      %p123 = pneg %p117
      %p124 = scmp.eq.s32.totalorder %s18, 15
      %p125 = por %p123, %p124
      %p126 = scmp.ne.s32.totalorder %s118, %s121
      %p127 = scmp.eq.s32.totalorder %s18, 0
      %p128 = por %p126, %p127
      %p129 = scmp.ne.s32.totalorder %s118, %s121
      %p130 = scmp.eq.s32.totalorder %s23, 15
      %p131 = por %p129, %p130
      %p132 = scmp.ne.s32.totalorder %s121, %s122
      %p133 = scmp.eq.s32.totalorder %s23, 0
      %p134 = por %p132, %p133
      %p135 = scmp.ne.s32.totalorder %s121, %s122
      %p136 = scmp.eq.s32.totalorder %s24, 15
      %p137 = por %p135, %p136
      %p139 = scmp.ne.s32.totalorder %s122, %s138
      %p140 = scmp.eq.s32.totalorder %s24, 0
      %p141 = por %p139, %p140
      %s142 = ssub.s32 %s25, %s51
      %s143 = ssub.s32 %s26, %s47
      %s144 = sor.u32 %s142, %s143
      %s145 = ssub.s32 %s27, %s43
      %s146 = sor.u32 %s144, %s145
      %p147 = scmp.eq.s32.totalorder %s146, 0
      %s149 = sadd.s32 %s148, 1
      %s150 = scalar_select %p147, %s148, %s149
      %p153 = pneg %p147
      %p154 = scmp.eq.s32.totalorder %s18, 15
      %p155 = por %p153, %p154
      %p156 = scmp.ne.s32.totalorder %s148, %s151
      %p157 = scmp.eq.s32.totalorder %s18, 0
      %p158 = por %p156, %p157
      %p159 = scmp.ne.s32.totalorder %s148, %s151
      %p160 = scmp.eq.s32.totalorder %s23, 15
      %p161 = por %p159, %p160
      %p162 = scmp.ne.s32.totalorder %s151, %s152
      %p163 = scmp.eq.s32.totalorder %s23, 0
      %p164 = por %p162, %p163
      %p165 = scmp.ne.s32.totalorder %s151, %s152
      %p166 = scmp.eq.s32.totalorder %s24, 15
      %p167 = por %p165, %p166
      %p169 = scmp.ne.s32.totalorder %s152, %s168
      %p170 = scmp.eq.s32.totalorder %s24, 0
      %p171 = por %p169, %p170
      %p172 = scmp.le.s32.totalorder 1, %s18
      %p173 = scmp.lt.s32.totalorder %s18, 17
      %p174 = pnand %p172, %p173
      %p175 = pneg %p174
      // Predicated region
      $region9: #{tpu_custom_call.1} parent=5 // pred_check
        _
      $region10: #{tpu_custom_call.1} parent=5 // pred_check_branch
        %177 = sbr.rel (%p174) target = $region12
      $region11: #{tpu_custom_call.1} parent=5 // pred_region
        %s178 = ssub.s32 %s18, 1
      $region12: #{tpu_custom_call.1} parent=5 // pred_fallthru
        _
      %p179 = scmp.lt.s32.totalorder %s18, 16
      // Predicated region
      $region13: #{tpu_custom_call.1} parent=5 // pred_check
        %p180 = pneg %p179
      $region14: #{tpu_custom_call.1} parent=5 // pred_check_branch
        %182 = sbr.rel (%p180) target = $region16
      $region15: #{tpu_custom_call.1} parent=5 // pred_region
        // Predicated region
        $region17: #{tpu_custom_call.1} parent=15 // pred_check
          %p183 = pneg %p68
        $region18: #{tpu_custom_call.1} parent=15 // pred_check_branch
          %185 = sbr.rel (%p183) target = $region20
        $region19: #{tpu_custom_call.1} parent=15 // pred_region
          #allocation13 [shape = 'u32[6]{0}', space=smem, size = 0x18, scoped, tag = 'DMA stride descriptor']
          %s186 = sand.u32 %s58, 1
          %s187 = scalar_lea.sflag [#allocation6], %s186
          %s188 = sand.u32 %s58, 1
          %s189 = smul.addr %s188, 256
          %s190 = scalar_lea.vmem [#allocation5], %s189
          %s191 = smul.u32 2, %s26
          %s192 = smul.u32 16, %s27
          %194 = vsyncadd %s187, 0
          %s195 = smul.addr %s191, 32
          %s196 = sadd.s32 %s192, %s195
          %s197 = smul.addr %s25, 128
          %s198 = sadd.s32 %s196, %s197
          %s199 = smul.addr %s198, 8
          %s200 = scalar_lea.hbm %s0, %s199
          %s202 = sshll.u32 1, 14
          %s203 = sxor.u32 4294967295, %s202
          %s205 = sld [smem:[#allocation0]]
          %s206 = sadd.s32 2, %s205
          %s208 = sshll.u32 7, 26
          %s209 = sxor.u32 4294967295, %s208
          %s210 = sand.u32 0, %s209
          %s211 = sshll.u32 %s206, 26
          %s212 = sor.u32 %s210, %s211
          %s213 = sshll.u32 %s200, 4
          %s214 = int_to_ptr.hbm [resolvable:$true] %s213
          %s215 = sshll.u32 %s190, 4
          %s216 = int_to_ptr.vmem [resolvable:$true] %s215
          %222 = sst [smem:[#allocation13]] 4096
          %s223 = scalar_lea.smem [#allocation13], 1
          %224 = sst [smem:[%s223]] 2048
          %s225 = scalar_lea.smem [#allocation13], 2
          %226 = sst [smem:[%s225]] 16
          %s227 = scalar_lea.smem [#allocation13], 3
          %228 = sst [smem:[%s227]] 128
          %s229 = scalar_lea.smem [#allocation13], 4
          %230 = sst [smem:[%s229]] 128
          %s231 = scalar_lea.smem [#allocation13], 5
          %232 = sst [smem:[%s231]] 8
          %234 = dma.general %s214, 4096, %s216, %s187, [#allocation12], [#allocation13], %s212, 0
        $region20: #{tpu_custom_call.1} parent=15 // pred_fallthru
          _
        // Predicated region
        $region21: #{tpu_custom_call.1} parent=15 // pred_check
          %p235 = pneg %p98
        $region22: #{tpu_custom_call.1} parent=15 // pred_check_branch
          %237 = sbr.rel (%p235) target = $region24
        $region23: #{tpu_custom_call.1} parent=15 // pred_region
          %s238 = sand.u32 %s18, 1
          %s239 = scalar_lea.sflag [#allocation9], %s238
          %s240 = sand.u32 %s88, 1
          %s241 = smul.addr %s240, 128
          %s242 = scalar_lea.vmem [#allocation8], %s241
          %s243 = smul.u32 16, %s28
          %245 = vsyncadd %s239, 0
          %s246 = smul.addr %s26, 32
          %s247 = sadd.s32 %s243, %s246
          %s248 = smul.addr %s25, 64
          %s249 = sadd.s32 %s247, %s248
          %s250 = smul.addr %s249, 8
          %s251 = scalar_lea.hbm %s1, %s250
          %s252 = sshll.u32 %s251, 4
          %s253 = int_to_ptr.hbm [resolvable:$true] %s252
          %s254 = sshll.u32 %s242, 4
          %s255 = int_to_ptr.vmem [resolvable:$true] %s254
          %260 = dma.hbm_to_vmem [thread:$0]  %s253, 2048, %s255, %s239, 128, 128, 8
        $region24: #{tpu_custom_call.1} parent=15 // pred_fallthru
          _
        // Predicated region
        $region25: #{tpu_custom_call.1} parent=15 // pred_check
          %p261 = pneg %p128
        $region26: #{tpu_custom_call.1} parent=15 // pred_check_branch
          %263 = sbr.rel (%p261) target = $region28
        $region27: #{tpu_custom_call.1} parent=15 // pred_region
          %s264 = sand.u32 %s18, 1
          %s265 = scalar_lea.sflag [#allocation9], %s264
          %s266 = sand.u32 %s118, 1
          %s267 = smul.addr %s266, 128
          %s268 = scalar_lea.vmem [#allocation10], %s267
          %s269 = smul.u32 16, %s28
          %271 = vsyncadd %s265, 0
          %s272 = smul.addr %s26, 32
          %s273 = sadd.s32 %s269, %s272
          %s274 = smul.addr %s25, 64
          %s275 = sadd.s32 %s273, %s274
          %s276 = smul.addr %s275, 8
          %s277 = scalar_lea.hbm %s2, %s276
          %s278 = sshll.u32 %s277, 4
          %s279 = int_to_ptr.hbm [resolvable:$true] %s278
          %s280 = sshll.u32 %s268, 4
          %s281 = int_to_ptr.vmem [resolvable:$true] %s280
          %286 = dma.hbm_to_vmem [thread:$0]  %s279, 2048, %s281, %s265, 128, 128, 8
        $region28: #{tpu_custom_call.1} parent=15 // pred_fallthru
          _
      $region16: #{tpu_custom_call.1} parent=5 // pred_fallthru
        _
      %p287 = scmp.le.s32.totalorder 1, %s18
      %p288 = scmp.lt.s32.totalorder %s18, 17
      %p289 = pnand %p287, %p288
      %p290 = pneg %p289
      // Predicated region
      $region29: #{tpu_custom_call.1} parent=5 // pred_check
        _
      $region30: #{tpu_custom_call.1} parent=5 // pred_check_branch
        %292 = sbr.rel (%p289) target = $region32
      $region31: #{tpu_custom_call.1} parent=5 // pred_region
        %s293 = ssub.s32 %s18, 1
        %s294 = sand.u32 %s61, 1
        %s295 = scalar_lea.sflag [#allocation6], %s294
        %s296 = sand.u32 %s61, 1
        %s297 = smul.addr %s296, 256
        %s298 = scalar_lea.vmem [#allocation5], %s297
        // Predicated region
        $region33: #{tpu_custom_call.1} parent=31 // pred_check
          %p299 = pneg %p74
        $region34: #{tpu_custom_call.1} parent=31 // pred_check_branch
          %301 = sbr.rel (%p299) target = $region36
        $region35: #{tpu_custom_call.1} parent=31 // pred_region
          %303 = dma.done %s295, 4096
        $region36: #{tpu_custom_call.1} parent=31 // pred_fallthru
          _
        %s304 = sand.u32 %s23, 1
        %s305 = scalar_lea.sflag [#allocation9], %s304
        %s306 = sand.u32 %s91, 1
        %s307 = smul.addr %s306, 128
        %s308 = scalar_lea.vmem [#allocation8], %s307
        // Predicated region
        $region37: #{tpu_custom_call.1} parent=31 // pred_check
          %p309 = pneg %p104
        $region38: #{tpu_custom_call.1} parent=31 // pred_check_branch
          %311 = sbr.rel (%p309) target = $region40
        $region39: #{tpu_custom_call.1} parent=31 // pred_region
          %313 = dma.done %s305, 2048
        $region40: #{tpu_custom_call.1} parent=31 // pred_fallthru
          _
        %s314 = sand.u32 %s23, 1
        %s315 = scalar_lea.sflag [#allocation9], %s314
        %s316 = sand.u32 %s121, 1
        %s317 = smul.addr %s316, 128
        %s318 = scalar_lea.vmem [#allocation10], %s317
        // Predicated region
        $region41: #{tpu_custom_call.1} parent=31 // pred_check
          %p319 = pneg %p134
        $region42: #{tpu_custom_call.1} parent=31 // pred_check_branch
          %321 = sbr.rel (%p319) target = $region44
        $region43: #{tpu_custom_call.1} parent=31 // pred_region
          %323 = dma.done %s315, 2048
        $region44: #{tpu_custom_call.1} parent=31 // pred_fallthru
          _
        %s324 = sand.u32 %s61, 1
        %s325 = scalar_lea.sflag [#allocation6], %s324
        %s326 = sand.u32 %s61, 1
        %s327 = smul.addr %s326, 256
        %s328 = scalar_lea.vmem [#allocation5], %s327
        %p329 = pneg %p74
        %p330 = pneg %p71
        %s331 = sand.u32 %s23, 1
        %s332 = scalar_lea.sflag [#allocation9], %s331
        %s333 = sand.u32 %s91, 1
        %s334 = smul.addr %s333, 128
        %s335 = scalar_lea.vmem [#allocation8], %s334
        %p336 = pneg %p104
        %p337 = pneg %p101
        %s338 = sand.u32 %s23, 1
        %s339 = scalar_lea.sflag [#allocation9], %s338
        %s340 = sand.u32 %s121, 1
        %s341 = smul.addr %s340, 128
        %s342 = scalar_lea.vmem [#allocation10], %s341
        %p343 = pneg %p134
        %p344 = pneg %p131
        %p345 = pneg %p164
        %p346 = pneg %p161
        %s347 = sand.u32 %s151, 1
        %s348 = scalar_lea.sflag [#allocation7], %s347
        %s349 = sand.u32 %s151, 1
        %s350 = smul.addr %s349, 256
        %s351 = scalar_lea.vmem [#allocation11], %s350
        %s352 = smul.u32 2, %s30
        %s353 = smul.u32 16, %s31
        %s354 = smul.u32 16, %s32
        %s355 = smul.u32 16, %s32
        %s356 = smul.u32 2, %s30
        %s357 = smul.u32 16, %s31
        %p358 = scmp.eq.s32.totalorder %s32, 0
        // Predicated region
        $region45: #{tpu_custom_call.1} parent=31 // pred_check
          %p359 = pneg %p358
        $region46: #{tpu_custom_call.1} parent=31 // pred_check_branch
          %361 = sbr.rel (%p359) target = $region48
        $region47: #{tpu_custom_call.1} parent=31 // pred_region
          %vm362 = vcmask 7168
          %363 = vst.msk [vmem:[#allocation2] sm:$0xff] %vm362, -inf
          %364 = vst.msk [vmem:[#allocation2 + $0x8] sm:$0xff] %vm362, -inf
          %365 = vst.msk [vmem:[#allocation2 + $0x10] sm:$0xff] %vm362, -inf
          %366 = vst.msk [vmem:[#allocation2 + $0x18] sm:$0xff] %vm362, -inf
          %367 = vst.msk [vmem:[#allocation2 + $0x20] sm:$0xff] %vm362, -inf
          %368 = vst.msk [vmem:[#allocation2 + $0x28] sm:$0xff] %vm362, -inf
          %369 = vst.msk [vmem:[#allocation2 + $0x30] sm:$0xff] %vm362, -inf
          %370 = vst.msk [vmem:[#allocation2 + $0x38] sm:$0xff] %vm362, -inf
          %371 = vst.msk [vmem:[#allocation2 + $0x40] sm:$0xff] %vm362, -inf
          %372 = vst.msk [vmem:[#allocation2 + $0x48] sm:$0xff] %vm362, -inf
          %373 = vst.msk [vmem:[#allocation2 + $0x50] sm:$0xff] %vm362, -inf
          %374 = vst.msk [vmem:[#allocation2 + $0x58] sm:$0xff] %vm362, -inf
          %375 = vst.msk [vmem:[#allocation2 + $0x60] sm:$0xff] %vm362, -inf
          %376 = vst.msk [vmem:[#allocation2 + $0x68] sm:$0xff] %vm362, -inf
          %377 = vst.msk [vmem:[#allocation2 + $0x70] sm:$0xff] %vm362, -inf
          %378 = vst.msk [vmem:[#allocation2 + $0x78] sm:$0xff] %vm362, -inf
          %379 = vst.msk [vmem:[#allocation2 + $0x80] sm:$0xff] %vm362, -inf
          %380 = vst.msk [vmem:[#allocation2 + $0x88] sm:$0xff] %vm362, -inf
          %381 = vst.msk [vmem:[#allocation2 + $0x90] sm:$0xff] %vm362, -inf
          %382 = vst.msk [vmem:[#allocation2 + $0x98] sm:$0xff] %vm362, -inf
          %383 = vst.msk [vmem:[#allocation2 + $0xa0] sm:$0xff] %vm362, -inf
          %384 = vst.msk [vmem:[#allocation2 + $0xa8] sm:$0xff] %vm362, -inf
          %385 = vst.msk [vmem:[#allocation2 + $0xb0] sm:$0xff] %vm362, -inf
          %386 = vst.msk [vmem:[#allocation2 + $0xb8] sm:$0xff] %vm362, -inf
          %387 = vst.msk [vmem:[#allocation2 + $0xc0] sm:$0xff] %vm362, -inf
          %388 = vst.msk [vmem:[#allocation2 + $0xc8] sm:$0xff] %vm362, -inf
          %389 = vst.msk [vmem:[#allocation2 + $0xd0] sm:$0xff] %vm362, -inf
          %390 = vst.msk [vmem:[#allocation2 + $0xd8] sm:$0xff] %vm362, -inf
          %391 = vst.msk [vmem:[#allocation2 + $0xe0] sm:$0xff] %vm362, -inf
          %392 = vst.msk [vmem:[#allocation2 + $0xe8] sm:$0xff] %vm362, -inf
          %393 = vst.msk [vmem:[#allocation2 + $0xf0] sm:$0xff] %vm362, -inf
          %394 = vst.msk [vmem:[#allocation2 + $0xf8] sm:$0xff] %vm362, -inf
          %395 = vst.msk [vmem:[#allocation3] sm:$0xff] %vm362, 0.0
          %396 = vst.msk [vmem:[#allocation3 + $0x8] sm:$0xff] %vm362, 0.0
          %397 = vst.msk [vmem:[#allocation3 + $0x10] sm:$0xff] %vm362, 0.0
          %398 = vst.msk [vmem:[#allocation3 + $0x18] sm:$0xff] %vm362, 0.0
          %399 = vst.msk [vmem:[#allocation3 + $0x20] sm:$0xff] %vm362, 0.0
          %400 = vst.msk [vmem:[#allocation3 + $0x28] sm:$0xff] %vm362, 0.0
          %401 = vst.msk [vmem:[#allocation3 + $0x30] sm:$0xff] %vm362, 0.0
          %402 = vst.msk [vmem:[#allocation3 + $0x38] sm:$0xff] %vm362, 0.0
          %403 = vst.msk [vmem:[#allocation3 + $0x40] sm:$0xff] %vm362, 0.0
          %404 = vst.msk [vmem:[#allocation3 + $0x48] sm:$0xff] %vm362, 0.0
          %405 = vst.msk [vmem:[#allocation3 + $0x50] sm:$0xff] %vm362, 0.0
          %406 = vst.msk [vmem:[#allocation3 + $0x58] sm:$0xff] %vm362, 0.0
          %407 = vst.msk [vmem:[#allocation3 + $0x60] sm:$0xff] %vm362, 0.0
          %408 = vst.msk [vmem:[#allocation3 + $0x68] sm:$0xff] %vm362, 0.0
          %409 = vst.msk [vmem:[#allocation3 + $0x70] sm:$0xff] %vm362, 0.0
          %410 = vst.msk [vmem:[#allocation3 + $0x78] sm:$0xff] %vm362, 0.0
          %411 = vst.msk [vmem:[#allocation3 + $0x80] sm:$0xff] %vm362, 0.0
          %412 = vst.msk [vmem:[#allocation3 + $0x88] sm:$0xff] %vm362, 0.0
          %413 = vst.msk [vmem:[#allocation3 + $0x90] sm:$0xff] %vm362, 0.0
          %414 = vst.msk [vmem:[#allocation3 + $0x98] sm:$0xff] %vm362, 0.0
          %415 = vst.msk [vmem:[#allocation3 + $0xa0] sm:$0xff] %vm362, 0.0
          %416 = vst.msk [vmem:[#allocation3 + $0xa8] sm:$0xff] %vm362, 0.0
          %417 = vst.msk [vmem:[#allocation3 + $0xb0] sm:$0xff] %vm362, 0.0
          %418 = vst.msk [vmem:[#allocation3 + $0xb8] sm:$0xff] %vm362, 0.0
          %419 = vst.msk [vmem:[#allocation3 + $0xc0] sm:$0xff] %vm362, 0.0
          %420 = vst.msk [vmem:[#allocation3 + $0xc8] sm:$0xff] %vm362, 0.0
          %421 = vst.msk [vmem:[#allocation3 + $0xd0] sm:$0xff] %vm362, 0.0
          %422 = vst.msk [vmem:[#allocation3 + $0xd8] sm:$0xff] %vm362, 0.0
          %423 = vst.msk [vmem:[#allocation3 + $0xe0] sm:$0xff] %vm362, 0.0
          %424 = vst.msk [vmem:[#allocation3 + $0xe8] sm:$0xff] %vm362, 0.0
          %425 = vst.msk [vmem:[#allocation3 + $0xf0] sm:$0xff] %vm362, 0.0
          %426 = vst.msk [vmem:[#allocation3 + $0xf8] sm:$0xff] %vm362, 0.0
          %427 = vst [vmem:[#allocation4] sm:$0xff] 0.0
          %428 = vst [vmem:[#allocation4 + $0x8] sm:$0xff] 0.0
          %429 = vst [vmem:[#allocation4 + $0x10] sm:$0xff] 0.0
          %430 = vst [vmem:[#allocation4 + $0x18] sm:$0xff] 0.0
          %431 = vst [vmem:[#allocation4 + $0x20] sm:$0xff] 0.0
          %432 = vst [vmem:[#allocation4 + $0x28] sm:$0xff] 0.0
          %433 = vst [vmem:[#allocation4 + $0x30] sm:$0xff] 0.0
          %434 = vst [vmem:[#allocation4 + $0x38] sm:$0xff] 0.0
          %435 = vst [vmem:[#allocation4 + $0x40] sm:$0xff] 0.0
          %436 = vst [vmem:[#allocation4 + $0x48] sm:$0xff] 0.0
          %437 = vst [vmem:[#allocation4 + $0x50] sm:$0xff] 0.0
          %438 = vst [vmem:[#allocation4 + $0x58] sm:$0xff] 0.0
          %439 = vst [vmem:[#allocation4 + $0x60] sm:$0xff] 0.0
          %440 = vst [vmem:[#allocation4 + $0x68] sm:$0xff] 0.0
          %441 = vst [vmem:[#allocation4 + $0x70] sm:$0xff] 0.0
          %442 = vst [vmem:[#allocation4 + $0x78] sm:$0xff] 0.0
          %443 = vst [vmem:[#allocation4 + $0x80] sm:$0xff] 0.0
          %444 = vst [vmem:[#allocation4 + $0x88] sm:$0xff] 0.0
          %445 = vst [vmem:[#allocation4 + $0x90] sm:$0xff] 0.0
          %446 = vst [vmem:[#allocation4 + $0x98] sm:$0xff] 0.0
          %447 = vst [vmem:[#allocation4 + $0xa0] sm:$0xff] 0.0
          %448 = vst [vmem:[#allocation4 + $0xa8] sm:$0xff] 0.0
          %449 = vst [vmem:[#allocation4 + $0xb0] sm:$0xff] 0.0
          %450 = vst [vmem:[#allocation4 + $0xb8] sm:$0xff] 0.0
          %451 = vst [vmem:[#allocation4 + $0xc0] sm:$0xff] 0.0
          %452 = vst [vmem:[#allocation4 + $0xc8] sm:$0xff] 0.0
          %453 = vst [vmem:[#allocation4 + $0xd0] sm:$0xff] 0.0
          %454 = vst [vmem:[#allocation4 + $0xd8] sm:$0xff] 0.0
          %455 = vst [vmem:[#allocation4 + $0xe0] sm:$0xff] 0.0
          %456 = vst [vmem:[#allocation4 + $0xe8] sm:$0xff] 0.0
          %457 = vst [vmem:[#allocation4 + $0xf0] sm:$0xff] 0.0
          %458 = vst [vmem:[#allocation4 + $0xf8] sm:$0xff] 0.0
        $region48: #{tpu_custom_call.1} parent=31 // pred_fallthru
          _
        %v459 = vld [vmem:[%s298] sm:$0xff]
        %v460 = vld [vmem:[%s298 + $0x8] sm:$0xff]
        %v461 = vld [vmem:[%s298 + $0x10] sm:$0xff]
        %v462 = vld [vmem:[%s298 + $0x18] sm:$0xff]
        %v463 = vld [vmem:[%s298 + $0x20] sm:$0xff]
        %v464 = vld [vmem:[%s298 + $0x28] sm:$0xff]
        %v465 = vld [vmem:[%s298 + $0x30] sm:$0xff]
        %v466 = vld [vmem:[%s298 + $0x38] sm:$0xff]
        %v467 = vld [vmem:[%s298 + $0x40] sm:$0xff]
        %v468 = vld [vmem:[%s298 + $0x48] sm:$0xff]
        %v469 = vld [vmem:[%s298 + $0x50] sm:$0xff]
        %v470 = vld [vmem:[%s298 + $0x58] sm:$0xff]
        %v471 = vld [vmem:[%s298 + $0x60] sm:$0xff]
        %v472 = vld [vmem:[%s298 + $0x68] sm:$0xff]
        %v473 = vld [vmem:[%s298 + $0x70] sm:$0xff]
        %v474 = vld [vmem:[%s298 + $0x78] sm:$0xff]
        %v475 = vld [vmem:[%s298 + $0x80] sm:$0xff]
        %v476 = vld [vmem:[%s298 + $0x88] sm:$0xff]
        %v477 = vld [vmem:[%s298 + $0x90] sm:$0xff]
        %v478 = vld [vmem:[%s298 + $0x98] sm:$0xff]
        %v479 = vld [vmem:[%s298 + $0xa0] sm:$0xff]
        %v480 = vld [vmem:[%s298 + $0xa8] sm:$0xff]
        %v481 = vld [vmem:[%s298 + $0xb0] sm:$0xff]
        %v482 = vld [vmem:[%s298 + $0xb8] sm:$0xff]
        %v483 = vld [vmem:[%s298 + $0xc0] sm:$0xff]
        %v484 = vld [vmem:[%s298 + $0xc8] sm:$0xff]
        %v485 = vld [vmem:[%s298 + $0xd0] sm:$0xff]
        %v486 = vld [vmem:[%s298 + $0xd8] sm:$0xff]
        %v487 = vld [vmem:[%s298 + $0xe0] sm:$0xff]
        %v488 = vld [vmem:[%s298 + $0xe8] sm:$0xff]
        %v489 = vld [vmem:[%s298 + $0xf0] sm:$0xff]
        %v490 = vld [vmem:[%s298 + $0xf8] sm:$0xff]
        %v491 = vmul.f32 %v459, 0.088388346
        %v492 = vmul.f32 %v460, 0.088388346
        %v493 = vmul.f32 %v461, 0.088388346
        %v494 = vmul.f32 %v462, 0.088388346
        %v495 = vmul.f32 %v463, 0.088388346
        %v496 = vmul.f32 %v464, 0.088388346
        %v497 = vmul.f32 %v465, 0.088388346
        %v498 = vmul.f32 %v466, 0.088388346
        %v499 = vmul.f32 %v467, 0.088388346
        %v500 = vmul.f32 %v468, 0.088388346
        %v501 = vmul.f32 %v469, 0.088388346
        %v502 = vmul.f32 %v470, 0.088388346
        %v503 = vmul.f32 %v471, 0.088388346
        %v504 = vmul.f32 %v472, 0.088388346
        %v505 = vmul.f32 %v473, 0.088388346
        %v506 = vmul.f32 %v474, 0.088388346
        %v507 = vmul.f32 %v475, 0.088388346
        %v508 = vmul.f32 %v476, 0.088388346
        %v509 = vmul.f32 %v477, 0.088388346
        %v510 = vmul.f32 %v478, 0.088388346
        %v511 = vmul.f32 %v479, 0.088388346
        %v512 = vmul.f32 %v480, 0.088388346
        %v513 = vmul.f32 %v481, 0.088388346
        %v514 = vmul.f32 %v482, 0.088388346
        %v515 = vmul.f32 %v483, 0.088388346
        %v516 = vmul.f32 %v484, 0.088388346
        %v517 = vmul.f32 %v485, 0.088388346
        %v518 = vmul.f32 %v486, 0.088388346
        %v519 = vmul.f32 %v487, 0.088388346
        %v520 = vmul.f32 %v488, 0.088388346
        %v521 = vmul.f32 %v489, 0.088388346
        %v522 = vmul.f32 %v490, 0.088388346
        %v523 = vld [vmem:[%s308] sm:$0xff]
        %v524 = vld [vmem:[%s308 + $0x8] sm:$0xff]
        %v525 = vld [vmem:[%s308 + $0x10] sm:$0xff]
        %v526 = vld [vmem:[%s308 + $0x18] sm:$0xff]
        %v527 = vld [vmem:[%s308 + $0x20] sm:$0xff]
        %v528 = vld [vmem:[%s308 + $0x28] sm:$0xff]
        %v529 = vld [vmem:[%s308 + $0x30] sm:$0xff]
        %v530 = vld [vmem:[%s308 + $0x38] sm:$0xff]
        %v531 = vld [vmem:[%s308 + $0x40] sm:$0xff]
        %v532 = vld [vmem:[%s308 + $0x48] sm:$0xff]
        %v533 = vld [vmem:[%s308 + $0x50] sm:$0xff]
        %v534 = vld [vmem:[%s308 + $0x58] sm:$0xff]
        %v535 = vld [vmem:[%s308 + $0x60] sm:$0xff]
        %v536 = vld [vmem:[%s308 + $0x68] sm:$0xff]
        %v537 = vld [vmem:[%s308 + $0x70] sm:$0xff]
        %v538 = vld [vmem:[%s308 + $0x78] sm:$0xff]
        %v539 = vld [vmem:[%s318] sm:$0xff]
        %v540 = vld [vmem:[%s318 + $0x8] sm:$0xff]
        %v541 = vld [vmem:[%s318 + $0x10] sm:$0xff]
        %v542 = vld [vmem:[%s318 + $0x18] sm:$0xff]
        %v543 = vld [vmem:[%s318 + $0x20] sm:$0xff]
        %v544 = vld [vmem:[%s318 + $0x28] sm:$0xff]
        %v545 = vld [vmem:[%s318 + $0x30] sm:$0xff]
        %v546 = vld [vmem:[%s318 + $0x38] sm:$0xff]
        %v547 = vld [vmem:[%s318 + $0x40] sm:$0xff]
        %v548 = vld [vmem:[%s318 + $0x48] sm:$0xff]
        %v549 = vld [vmem:[%s318 + $0x50] sm:$0xff]
        %v550 = vld [vmem:[%s318 + $0x58] sm:$0xff]
        %v551 = vld [vmem:[%s318 + $0x60] sm:$0xff]
        %v552 = vld [vmem:[%s318 + $0x68] sm:$0xff]
        %v553 = vld [vmem:[%s318 + $0x70] sm:$0xff]
        %v554 = vld [vmem:[%s318 + $0x78] sm:$0xff]
        %555 = vmatpush.xpose.msra.mxu0 %v538
        %556 = vmatpush.xpose.msra.mxu0 %v537
        %557 = vmatpush.xpose.msra.mxu0 %v536
        %558 = vmatpush.xpose.msra.mxu0 %v535
        %559 = vmatpush.xpose.msra.mxu0 %v534
        %560 = vmatpush.xpose.msra.mxu0 %v533
        %561 = vmatpush.xpose.msra.mxu0 %v532
        %562 = vmatpush.xpose.msra.mxu0 %v531
        %563 = vmatpush.xpose.msra.mxu0 %v530
        %564 = vmatpush.xpose.msra.mxu0 %v529
        %565 = vmatpush.xpose.msra.mxu0 %v528
        %566 = vmatpush.xpose.msra.mxu0 %v527
        %567 = vmatpush.xpose.msra.mxu0 %v526
        %568 = vmatpush.xpose.msra.mxu0 %v525
        %569 = vmatpush.xpose.msra.mxu0 %v524
        %570 = vmatpush.xpose.msra.mxu0 %v523
        %571 = vmatmul.f32.gmra.mxu0 %v491
        %v572 = vpop.f32.mrf.mxu0
        %v573 = vadd.f32 0.0, %v572
        %574 = vmatmul.f32.gmra.mxu0 %v492
        %v575 = vpop.f32.mrf.mxu0
        %v576 = vadd.f32 0.0, %v575
        %577 = vmatmul.f32.gmra.mxu0 %v493
        %v578 = vpop.f32.mrf.mxu0
        %v579 = vadd.f32 0.0, %v578
        %580 = vmatmul.f32.gmra.mxu0 %v494
        %v581 = vpop.f32.mrf.mxu0
        %v582 = vadd.f32 0.0, %v581
        %583 = vmatmul.f32.gmra.mxu0 %v495
        %v584 = vpop.f32.mrf.mxu0
        %v585 = vadd.f32 0.0, %v584
        %586 = vmatmul.f32.gmra.mxu0 %v496
        %v587 = vpop.f32.mrf.mxu0
        %v588 = vadd.f32 0.0, %v587
        %589 = vmatmul.f32.gmra.mxu0 %v497
        %v590 = vpop.f32.mrf.mxu0
        %v591 = vadd.f32 0.0, %v590
        %592 = vmatmul.f32.gmra.mxu0 %v498
        %v593 = vpop.f32.mrf.mxu0
        %v594 = vadd.f32 0.0, %v593
        %595 = vmatmul.f32.gmra.mxu0 %v499
        %v596 = vpop.f32.mrf.mxu0
        %v597 = vadd.f32 0.0, %v596
        %598 = vmatmul.f32.gmra.mxu0 %v500
        %v599 = vpop.f32.mrf.mxu0
        %v600 = vadd.f32 0.0, %v599
        %601 = vmatmul.f32.gmra.mxu0 %v501
        %v602 = vpop.f32.mrf.mxu0
        %v603 = vadd.f32 0.0, %v602
        %604 = vmatmul.f32.gmra.mxu0 %v502
        %v605 = vpop.f32.mrf.mxu0
        %v606 = vadd.f32 0.0, %v605
        %607 = vmatmul.f32.gmra.mxu0 %v503
        %v608 = vpop.f32.mrf.mxu0
        %v609 = vadd.f32 0.0, %v608
        %610 = vmatmul.f32.gmra.mxu0 %v504
        %v611 = vpop.f32.mrf.mxu0
        %v612 = vadd.f32 0.0, %v611
        %613 = vmatmul.f32.gmra.mxu0 %v505
        %v614 = vpop.f32.mrf.mxu0
        %v615 = vadd.f32 0.0, %v614
        %616 = vmatmul.f32.gmra.mxu0 %v506
        %v617 = vpop.f32.mrf.mxu0
        %v618 = vadd.f32 0.0, %v617
        %619 = vmatmul.f32.gmra.mxu0 %v507
        %v620 = vpop.f32.mrf.mxu0
        %v621 = vadd.f32 0.0, %v620
        %622 = vmatmul.f32.gmra.mxu0 %v508
        %v623 = vpop.f32.mrf.mxu0
        %v624 = vadd.f32 0.0, %v623
        %625 = vmatmul.f32.gmra.mxu0 %v509
        %v626 = vpop.f32.mrf.mxu0
        %v627 = vadd.f32 0.0, %v626
        %628 = vmatmul.f32.gmra.mxu0 %v510
        %v629 = vpop.f32.mrf.mxu0
        %v630 = vadd.f32 0.0, %v629
        %631 = vmatmul.f32.gmra.mxu0 %v511
        %v632 = vpop.f32.mrf.mxu0
        %v633 = vadd.f32 0.0, %v632
        %634 = vmatmul.f32.gmra.mxu0 %v512
        %v635 = vpop.f32.mrf.mxu0
        %v636 = vadd.f32 0.0, %v635
        %637 = vmatmul.f32.gmra.mxu0 %v513
        %v638 = vpop.f32.mrf.mxu0
        %v639 = vadd.f32 0.0, %v638
        %640 = vmatmul.f32.gmra.mxu0 %v514
        %v641 = vpop.f32.mrf.mxu0
        %v642 = vadd.f32 0.0, %v641
        %643 = vmatmul.f32.gmra.mxu0 %v515
        %v644 = vpop.f32.mrf.mxu0
        %v645 = vadd.f32 0.0, %v644
        %646 = vmatmul.f32.gmra.mxu0 %v516
        %v647 = vpop.f32.mrf.mxu0
        %v648 = vadd.f32 0.0, %v647
        %649 = vmatmul.f32.gmra.mxu0 %v517
        %v650 = vpop.f32.mrf.mxu0
        %v651 = vadd.f32 0.0, %v650
        %652 = vmatmul.f32.gmra.mxu0 %v518
        %v653 = vpop.f32.mrf.mxu0
        %v654 = vadd.f32 0.0, %v653
        %655 = vmatmul.f32.gmra.mxu0 %v519
        %v656 = vpop.f32.mrf.mxu0
        %v657 = vadd.f32 0.0, %v656
        %658 = vmatmul.f32.gmra.mxu0 %v520
        %v659 = vpop.f32.mrf.mxu0
        %v660 = vadd.f32 0.0, %v659
        %661 = vmatmul.f32.gmra.mxu0 %v521
        %v662 = vpop.f32.mrf.mxu0
        %v663 = vadd.f32 0.0, %v662
        %664 = vmatmul.f32.gmra.mxu0 %v522
        %v665 = vpop.f32.mrf.mxu0
        %v666 = vadd.f32 0.0, %v665
        %667 = vdwg.mxu0
        %v668 = vld [vmem:[#allocation2] sm:$0xff]
        %v669 = vld [vmem:[#allocation2 + $0x8] sm:$0xff]
        %v670 = vld [vmem:[#allocation2 + $0x10] sm:$0xff]
        %v671 = vld [vmem:[#allocation2 + $0x18] sm:$0xff]
        %v672 = vld [vmem:[#allocation2 + $0x20] sm:$0xff]
        %v673 = vld [vmem:[#allocation2 + $0x28] sm:$0xff]
        %v674 = vld [vmem:[#allocation2 + $0x30] sm:$0xff]
        %v675 = vld [vmem:[#allocation2 + $0x38] sm:$0xff]
        %v676 = vld [vmem:[#allocation2 + $0x40] sm:$0xff]
        %v677 = vld [vmem:[#allocation2 + $0x48] sm:$0xff]
        %v678 = vld [vmem:[#allocation2 + $0x50] sm:$0xff]
        %v679 = vld [vmem:[#allocation2 + $0x58] sm:$0xff]
        %v680 = vld [vmem:[#allocation2 + $0x60] sm:$0xff]
        %v681 = vld [vmem:[#allocation2 + $0x68] sm:$0xff]
        %v682 = vld [vmem:[#allocation2 + $0x70] sm:$0xff]
        %v683 = vld [vmem:[#allocation2 + $0x78] sm:$0xff]
        %v684 = vld [vmem:[#allocation2 + $0x80] sm:$0xff]
        %v685 = vld [vmem:[#allocation2 + $0x88] sm:$0xff]
        %v686 = vld [vmem:[#allocation2 + $0x90] sm:$0xff]
        %v687 = vld [vmem:[#allocation2 + $0x98] sm:$0xff]
        %v688 = vld [vmem:[#allocation2 + $0xa0] sm:$0xff]
        %v689 = vld [vmem:[#allocation2 + $0xa8] sm:$0xff]
        %v690 = vld [vmem:[#allocation2 + $0xb0] sm:$0xff]
        %v691 = vld [vmem:[#allocation2 + $0xb8] sm:$0xff]
        %v692 = vld [vmem:[#allocation2 + $0xc0] sm:$0xff]
        %v693 = vld [vmem:[#allocation2 + $0xc8] sm:$0xff]
        %v694 = vld [vmem:[#allocation2 + $0xd0] sm:$0xff]
        %v695 = vld [vmem:[#allocation2 + $0xd8] sm:$0xff]
        %v696 = vld [vmem:[#allocation2 + $0xe0] sm:$0xff]
        %v697 = vld [vmem:[#allocation2 + $0xe8] sm:$0xff]
        %v698 = vld [vmem:[#allocation2 + $0xf0] sm:$0xff]
        %v699 = vld [vmem:[#allocation2 + $0xf8] sm:$0xff]
        %700 = vmax.xlane.f32.xlu0 %v573
        %v701 = vpop.xlane.xlu0 %700
        %702 = vmax.xlane.f32.xlu0 %v576
        %v703 = vpop.xlane.xlu0 %702
        %704 = vmax.xlane.f32.xlu0 %v579
        %v705 = vpop.xlane.xlu0 %704
        %706 = vmax.xlane.f32.xlu0 %v582
        %v707 = vpop.xlane.xlu0 %706
        %708 = vmax.xlane.f32.xlu0 %v585
        %v709 = vpop.xlane.xlu0 %708
        %710 = vmax.xlane.f32.xlu0 %v588
        %v711 = vpop.xlane.xlu0 %710
        %712 = vmax.xlane.f32.xlu0 %v591
        %v713 = vpop.xlane.xlu0 %712
        %714 = vmax.xlane.f32.xlu0 %v594
        %v715 = vpop.xlane.xlu0 %714
        %716 = vmax.xlane.f32.xlu0 %v597
        %v717 = vpop.xlane.xlu0 %716
        %718 = vmax.xlane.f32.xlu0 %v600
        %v719 = vpop.xlane.xlu0 %718
        %720 = vmax.xlane.f32.xlu0 %v603
        %v721 = vpop.xlane.xlu0 %720
        %722 = vmax.xlane.f32.xlu0 %v606
        %v723 = vpop.xlane.xlu0 %722
        %724 = vmax.xlane.f32.xlu0 %v609
        %v725 = vpop.xlane.xlu0 %724
        %726 = vmax.xlane.f32.xlu0 %v612
        %v727 = vpop.xlane.xlu0 %726
        %728 = vmax.xlane.f32.xlu0 %v615
        %v729 = vpop.xlane.xlu0 %728
        %730 = vmax.xlane.f32.xlu0 %v618
        %v731 = vpop.xlane.xlu0 %730
        %732 = vmax.xlane.f32.xlu0 %v621
        %v733 = vpop.xlane.xlu0 %732
        %734 = vmax.xlane.f32.xlu0 %v624
        %v735 = vpop.xlane.xlu0 %734
        %736 = vmax.xlane.f32.xlu0 %v627
        %v737 = vpop.xlane.xlu0 %736
        %738 = vmax.xlane.f32.xlu0 %v630
        %v739 = vpop.xlane.xlu0 %738
        %740 = vmax.xlane.f32.xlu0 %v633
        %v741 = vpop.xlane.xlu0 %740
        %742 = vmax.xlane.f32.xlu0 %v636
        %v743 = vpop.xlane.xlu0 %742
        %744 = vmax.xlane.f32.xlu0 %v639
        %v745 = vpop.xlane.xlu0 %744
        %746 = vmax.xlane.f32.xlu0 %v642
        %v747 = vpop.xlane.xlu0 %746
        %748 = vmax.xlane.f32.xlu0 %v645
        %v749 = vpop.xlane.xlu0 %748
        %750 = vmax.xlane.f32.xlu0 %v648
        %v751 = vpop.xlane.xlu0 %750
        %752 = vmax.xlane.f32.xlu0 %v651
        %v753 = vpop.xlane.xlu0 %752
        %754 = vmax.xlane.f32.xlu0 %v654
        %v755 = vpop.xlane.xlu0 %754
        %756 = vmax.xlane.f32.xlu0 %v657
        %v757 = vpop.xlane.xlu0 %756
        %758 = vmax.xlane.f32.xlu0 %v660
        %v759 = vpop.xlane.xlu0 %758
        %760 = vmax.xlane.f32.xlu0 %v663
        %v761 = vpop.xlane.xlu0 %760
        %762 = vmax.xlane.f32.xlu0 %v666
        %v763 = vpop.xlane.xlu0 %762
        %v764 = vmax.f32 %v668, %v701
        %v765 = vmax.f32 %v669, %v703
        %v766 = vmax.f32 %v670, %v705
        %v767 = vmax.f32 %v671, %v707
        %v768 = vmax.f32 %v672, %v709
        %v769 = vmax.f32 %v673, %v711
        %v770 = vmax.f32 %v674, %v713
        %v771 = vmax.f32 %v675, %v715
        %v772 = vmax.f32 %v676, %v717
        %v773 = vmax.f32 %v677, %v719
        %v774 = vmax.f32 %v678, %v721
        %v775 = vmax.f32 %v679, %v723
        %v776 = vmax.f32 %v680, %v725
        %v777 = vmax.f32 %v681, %v727
        %v778 = vmax.f32 %v682, %v729
        %v779 = vmax.f32 %v683, %v731
        %v780 = vmax.f32 %v684, %v733
        %v781 = vmax.f32 %v685, %v735
        %v782 = vmax.f32 %v686, %v737
        %v783 = vmax.f32 %v687, %v739
        %v784 = vmax.f32 %v688, %v741
        %v785 = vmax.f32 %v689, %v743
        %v786 = vmax.f32 %v690, %v745
        %v787 = vmax.f32 %v691, %v747
        %v788 = vmax.f32 %v692, %v749
        %v789 = vmax.f32 %v693, %v751
        %v790 = vmax.f32 %v694, %v753
        %v791 = vmax.f32 %v695, %v755
        %v792 = vmax.f32 %v696, %v757
        %v793 = vmax.f32 %v697, %v759
        %v794 = vmax.f32 %v698, %v761
        %v795 = vmax.f32 %v699, %v763
        %v796 = vsub.f32 %v668, %v764
        %v797 = vsub.f32 %v669, %v765
        %v798 = vsub.f32 %v670, %v766
        %v799 = vsub.f32 %v671, %v767
        %v800 = vsub.f32 %v672, %v768
        %v801 = vsub.f32 %v673, %v769
        %v802 = vsub.f32 %v674, %v770
        %v803 = vsub.f32 %v675, %v771
        %v804 = vsub.f32 %v676, %v772
        %v805 = vsub.f32 %v677, %v773
        %v806 = vsub.f32 %v678, %v774
        %v807 = vsub.f32 %v679, %v775
        %v808 = vsub.f32 %v680, %v776
        %v809 = vsub.f32 %v681, %v777
        %v810 = vsub.f32 %v682, %v778
        %v811 = vsub.f32 %v683, %v779
        %v812 = vsub.f32 %v684, %v780
        %v813 = vsub.f32 %v685, %v781
        %v814 = vsub.f32 %v686, %v782
        %v815 = vsub.f32 %v687, %v783
        %v816 = vsub.f32 %v688, %v784
        %v817 = vsub.f32 %v689, %v785
        %v818 = vsub.f32 %v690, %v786
        %v819 = vsub.f32 %v691, %v787
        %v820 = vsub.f32 %v692, %v788
        %v821 = vsub.f32 %v693, %v789
        %v822 = vsub.f32 %v694, %v790
        %v823 = vsub.f32 %v695, %v791
        %v824 = vsub.f32 %v696, %v792
        %v825 = vsub.f32 %v697, %v793
        %v826 = vsub.f32 %v698, %v794
        %v827 = vsub.f32 %v699, %v795
        %v828 = vmul.f32 %v796, 1.442695
        %v829 = vpow.pop %v828
        %v830 = vmul.f32 %v797, 1.442695
        %v831 = vpow.pop %v830
        %v832 = vmul.f32 %v798, 1.442695
        %v833 = vpow.pop %v832
        %v834 = vmul.f32 %v799, 1.442695
        %v835 = vpow.pop %v834
        %v836 = vmul.f32 %v800, 1.442695
        %v837 = vpow.pop %v836
        %v838 = vmul.f32 %v801, 1.442695
        %v839 = vpow.pop %v838
        %v840 = vmul.f32 %v802, 1.442695
        %v841 = vpow.pop %v840
        %v842 = vmul.f32 %v803, 1.442695
        %v843 = vpow.pop %v842
        %v844 = vmul.f32 %v804, 1.442695
        %v845 = vpow.pop %v844
        %v846 = vmul.f32 %v805, 1.442695
        %v847 = vpow.pop %v846
        %v848 = vmul.f32 %v806, 1.442695
        %v849 = vpow.pop %v848
        %v850 = vmul.f32 %v807, 1.442695
        %v851 = vpow.pop %v850
        %v852 = vmul.f32 %v808, 1.442695
        %v853 = vpow.pop %v852
        %v854 = vmul.f32 %v809, 1.442695
        %v855 = vpow.pop %v854
        %v856 = vmul.f32 %v810, 1.442695
        %v857 = vpow.pop %v856
        %v858 = vmul.f32 %v811, 1.442695
        %v859 = vpow.pop %v858
        %v860 = vmul.f32 %v812, 1.442695
        %v861 = vpow.pop %v860
        %v862 = vmul.f32 %v813, 1.442695
        %v863 = vpow.pop %v862
        %v864 = vmul.f32 %v814, 1.442695
        %v865 = vpow.pop %v864
        %v866 = vmul.f32 %v815, 1.442695
        %v867 = vpow.pop %v866
        %v868 = vmul.f32 %v816, 1.442695
        %v869 = vpow.pop %v868
        %v870 = vmul.f32 %v817, 1.442695
        %v871 = vpow.pop %v870
        %v872 = vmul.f32 %v818, 1.442695
        %v873 = vpow.pop %v872
        %v874 = vmul.f32 %v819, 1.442695
        %v875 = vpow.pop %v874
        %v876 = vmul.f32 %v820, 1.442695
        %v877 = vpow.pop %v876
        %v878 = vmul.f32 %v821, 1.442695
        %v879 = vpow.pop %v878
        %v880 = vmul.f32 %v822, 1.442695
        %v881 = vpow.pop %v880
        %v882 = vmul.f32 %v823, 1.442695
        %v883 = vpow.pop %v882
        %v884 = vmul.f32 %v824, 1.442695
        %v885 = vpow.pop %v884
        %v886 = vmul.f32 %v825, 1.442695
        %v887 = vpow.pop %v886
        %v888 = vmul.f32 %v826, 1.442695
        %v889 = vpow.pop %v888
        %v890 = vmul.f32 %v827, 1.442695
        %v891 = vpow.pop %v890
        %893 = vset.pattern.permute.xlu0 0
        %894 = vperm.xlu0 %893, %v764
        %v895 = vpop.permute.xlu0 %894
        %898 = vset.pattern.permute.xlu0 0
        %899 = vperm.xlu0 %898, %v765
        %v900 = vpop.permute.xlu0 %899
        %903 = vset.pattern.permute.xlu0 0
        %904 = vperm.xlu0 %903, %v766
        %v905 = vpop.permute.xlu0 %904
        %908 = vset.pattern.permute.xlu0 0
        %909 = vperm.xlu0 %908, %v767
        %v910 = vpop.permute.xlu0 %909
        %913 = vset.pattern.permute.xlu0 0
        %914 = vperm.xlu0 %913, %v768
        %v915 = vpop.permute.xlu0 %914
        %918 = vset.pattern.permute.xlu0 0
        %919 = vperm.xlu0 %918, %v769
        %v920 = vpop.permute.xlu0 %919
        %923 = vset.pattern.permute.xlu0 0
        %924 = vperm.xlu0 %923, %v770
        %v925 = vpop.permute.xlu0 %924
        %928 = vset.pattern.permute.xlu0 0
        %929 = vperm.xlu0 %928, %v771
        %v930 = vpop.permute.xlu0 %929
        %933 = vset.pattern.permute.xlu0 0
        %934 = vperm.xlu0 %933, %v772
        %v935 = vpop.permute.xlu0 %934
        %938 = vset.pattern.permute.xlu0 0
        %939 = vperm.xlu0 %938, %v773
        %v940 = vpop.permute.xlu0 %939
        %943 = vset.pattern.permute.xlu0 0
        %944 = vperm.xlu0 %943, %v774
        %v945 = vpop.permute.xlu0 %944
        %948 = vset.pattern.permute.xlu0 0
        %949 = vperm.xlu0 %948, %v775
        %v950 = vpop.permute.xlu0 %949
        %953 = vset.pattern.permute.xlu0 0
        %954 = vperm.xlu0 %953, %v776
        %v955 = vpop.permute.xlu0 %954
        %958 = vset.pattern.permute.xlu0 0
        %959 = vperm.xlu0 %958, %v777
        %v960 = vpop.permute.xlu0 %959
        %963 = vset.pattern.permute.xlu0 0
        %964 = vperm.xlu0 %963, %v778
        %v965 = vpop.permute.xlu0 %964
        %968 = vset.pattern.permute.xlu0 0
        %969 = vperm.xlu0 %968, %v779
        %v970 = vpop.permute.xlu0 %969
        %973 = vset.pattern.permute.xlu0 0
        %974 = vperm.xlu0 %973, %v780
        %v975 = vpop.permute.xlu0 %974
        %978 = vset.pattern.permute.xlu0 0
        %979 = vperm.xlu0 %978, %v781
        %v980 = vpop.permute.xlu0 %979
        %983 = vset.pattern.permute.xlu0 0
        %984 = vperm.xlu0 %983, %v782
        %v985 = vpop.permute.xlu0 %984
        %988 = vset.pattern.permute.xlu0 0
        %989 = vperm.xlu0 %988, %v783
        %v990 = vpop.permute.xlu0 %989
        %993 = vset.pattern.permute.xlu0 0
        %994 = vperm.xlu0 %993, %v784
        %v995 = vpop.permute.xlu0 %994
        %998 = vset.pattern.permute.xlu0 0
        %999 = vperm.xlu0 %998, %v785
        %v1000 = vpop.permute.xlu0 %999
        %1003 = vset.pattern.permute.xlu0 0
        %1004 = vperm.xlu0 %1003, %v786
        %v1005 = vpop.permute.xlu0 %1004
        %1008 = vset.pattern.permute.xlu0 0
        %1009 = vperm.xlu0 %1008, %v787
        %v1010 = vpop.permute.xlu0 %1009
        %1013 = vset.pattern.permute.xlu0 0
        %1014 = vperm.xlu0 %1013, %v788
        %v1015 = vpop.permute.xlu0 %1014
        %1018 = vset.pattern.permute.xlu0 0
        %1019 = vperm.xlu0 %1018, %v789
        %v1020 = vpop.permute.xlu0 %1019
        %1023 = vset.pattern.permute.xlu0 0
        %1024 = vperm.xlu0 %1023, %v790
        %v1025 = vpop.permute.xlu0 %1024
        %1028 = vset.pattern.permute.xlu0 0
        %1029 = vperm.xlu0 %1028, %v791
        %v1030 = vpop.permute.xlu0 %1029
        %1033 = vset.pattern.permute.xlu0 0
        %1034 = vperm.xlu0 %1033, %v792
        %v1035 = vpop.permute.xlu0 %1034
        %1038 = vset.pattern.permute.xlu0 0
        %1039 = vperm.xlu0 %1038, %v793
        %v1040 = vpop.permute.xlu0 %1039
        %1043 = vset.pattern.permute.xlu0 0
        %1044 = vperm.xlu0 %1043, %v794
        %v1045 = vpop.permute.xlu0 %1044
        %1048 = vset.pattern.permute.xlu0 0
        %1049 = vperm.xlu0 %1048, %v795
        %v1050 = vpop.permute.xlu0 %1049
        %v1052 = vsub.f32 %v573, %v895
        %v1053 = vsub.f32 %v576, %v900
        %v1054 = vsub.f32 %v579, %v905
        %v1055 = vsub.f32 %v582, %v910
        %v1056 = vsub.f32 %v585, %v915
        %v1057 = vsub.f32 %v588, %v920
        %v1058 = vsub.f32 %v591, %v925
        %v1059 = vsub.f32 %v594, %v930
        %v1060 = vsub.f32 %v597, %v935
        %v1061 = vsub.f32 %v600, %v940
        %v1062 = vsub.f32 %v603, %v945
        %v1063 = vsub.f32 %v606, %v950
        %v1064 = vsub.f32 %v609, %v955
        %v1065 = vsub.f32 %v612, %v960
        %v1066 = vsub.f32 %v615, %v965
        %v1067 = vsub.f32 %v618, %v970
        %v1068 = vsub.f32 %v621, %v975
        %v1069 = vsub.f32 %v624, %v980
        %v1070 = vsub.f32 %v627, %v985
        %v1071 = vsub.f32 %v630, %v990
        %v1072 = vsub.f32 %v633, %v995
        %v1073 = vsub.f32 %v636, %v1000
        %v1074 = vsub.f32 %v639, %v1005
        %v1075 = vsub.f32 %v642, %v1010
        %v1076 = vsub.f32 %v645, %v1015
        %v1077 = vsub.f32 %v648, %v1020
        %v1078 = vsub.f32 %v651, %v1025
        %v1079 = vsub.f32 %v654, %v1030
        %v1080 = vsub.f32 %v657, %v1035
        %v1081 = vsub.f32 %v660, %v1040
        %v1082 = vsub.f32 %v663, %v1045
        %v1083 = vsub.f32 %v666, %v1050
        %v1084 = vmul.f32 %v1052, 1.442695
        %v1085 = vpow.pop %v1084
        %v1086 = vmul.f32 %v1053, 1.442695
        %v1087 = vpow.pop %v1086
        %v1088 = vmul.f32 %v1054, 1.442695
        %v1089 = vpow.pop %v1088
        %v1090 = vmul.f32 %v1055, 1.442695
        %v1091 = vpow.pop %v1090
        %v1092 = vmul.f32 %v1056, 1.442695
        %v1093 = vpow.pop %v1092
        %v1094 = vmul.f32 %v1057, 1.442695
        %v1095 = vpow.pop %v1094
        %v1096 = vmul.f32 %v1058, 1.442695
        %v1097 = vpow.pop %v1096
        %v1098 = vmul.f32 %v1059, 1.442695
        %v1099 = vpow.pop %v1098
        %v1100 = vmul.f32 %v1060, 1.442695
        %v1101 = vpow.pop %v1100
        %v1102 = vmul.f32 %v1061, 1.442695
        %v1103 = vpow.pop %v1102
        %v1104 = vmul.f32 %v1062, 1.442695
        %v1105 = vpow.pop %v1104
        %v1106 = vmul.f32 %v1063, 1.442695
        %v1107 = vpow.pop %v1106
        %v1108 = vmul.f32 %v1064, 1.442695
        %v1109 = vpow.pop %v1108
        %v1110 = vmul.f32 %v1065, 1.442695
        %v1111 = vpow.pop %v1110
        %v1112 = vmul.f32 %v1066, 1.442695
        %v1113 = vpow.pop %v1112
        %v1114 = vmul.f32 %v1067, 1.442695
        %v1115 = vpow.pop %v1114
        %v1116 = vmul.f32 %v1068, 1.442695
        %v1117 = vpow.pop %v1116
        %v1118 = vmul.f32 %v1069, 1.442695
        %v1119 = vpow.pop %v1118
        %v1120 = vmul.f32 %v1070, 1.442695
        %v1121 = vpow.pop %v1120
        %v1122 = vmul.f32 %v1071, 1.442695
        %v1123 = vpow.pop %v1122
        %v1124 = vmul.f32 %v1072, 1.442695
        %v1125 = vpow.pop %v1124
        %v1126 = vmul.f32 %v1073, 1.442695
        %v1127 = vpow.pop %v1126
        %v1128 = vmul.f32 %v1074, 1.442695
        %v1129 = vpow.pop %v1128
        %v1130 = vmul.f32 %v1075, 1.442695
        %v1131 = vpow.pop %v1130
        %v1132 = vmul.f32 %v1076, 1.442695
        %v1133 = vpow.pop %v1132
        %v1134 = vmul.f32 %v1077, 1.442695
        %v1135 = vpow.pop %v1134
        %v1136 = vmul.f32 %v1078, 1.442695
        %v1137 = vpow.pop %v1136
        %v1138 = vmul.f32 %v1079, 1.442695
        %v1139 = vpow.pop %v1138
        %v1140 = vmul.f32 %v1080, 1.442695
        %v1141 = vpow.pop %v1140
        %v1142 = vmul.f32 %v1081, 1.442695
        %v1143 = vpow.pop %v1142
        %v1144 = vmul.f32 %v1082, 1.442695
        %v1145 = vpow.pop %v1144
        %v1146 = vmul.f32 %v1083, 1.442695
        %v1147 = vpow.pop %v1146
        %v1148 = vld [vmem:[#allocation3] sm:$0xff]
        %v1149 = vld [vmem:[#allocation3 + $0x8] sm:$0xff]
        %v1150 = vld [vmem:[#allocation3 + $0x10] sm:$0xff]
        %v1151 = vld [vmem:[#allocation3 + $0x18] sm:$0xff]
        %v1152 = vld [vmem:[#allocation3 + $0x20] sm:$0xff]
        %v1153 = vld [vmem:[#allocation3 + $0x28] sm:$0xff]
        %v1154 = vld [vmem:[#allocation3 + $0x30] sm:$0xff]
        %v1155 = vld [vmem:[#allocation3 + $0x38] sm:$0xff]
        %v1156 = vld [vmem:[#allocation3 + $0x40] sm:$0xff]
        %v1157 = vld [vmem:[#allocation3 + $0x48] sm:$0xff]
        %v1158 = vld [vmem:[#allocation3 + $0x50] sm:$0xff]
        %v1159 = vld [vmem:[#allocation3 + $0x58] sm:$0xff]
        %v1160 = vld [vmem:[#allocation3 + $0x60] sm:$0xff]
        %v1161 = vld [vmem:[#allocation3 + $0x68] sm:$0xff]
        %v1162 = vld [vmem:[#allocation3 + $0x70] sm:$0xff]
        %v1163 = vld [vmem:[#allocation3 + $0x78] sm:$0xff]
        %v1164 = vld [vmem:[#allocation3 + $0x80] sm:$0xff]
        %v1165 = vld [vmem:[#allocation3 + $0x88] sm:$0xff]
        %v1166 = vld [vmem:[#allocation3 + $0x90] sm:$0xff]
        %v1167 = vld [vmem:[#allocation3 + $0x98] sm:$0xff]
        %v1168 = vld [vmem:[#allocation3 + $0xa0] sm:$0xff]
        %v1169 = vld [vmem:[#allocation3 + $0xa8] sm:$0xff]
        %v1170 = vld [vmem:[#allocation3 + $0xb0] sm:$0xff]
        %v1171 = vld [vmem:[#allocation3 + $0xb8] sm:$0xff]
        %v1172 = vld [vmem:[#allocation3 + $0xc0] sm:$0xff]
        %v1173 = vld [vmem:[#allocation3 + $0xc8] sm:$0xff]
        %v1174 = vld [vmem:[#allocation3 + $0xd0] sm:$0xff]
        %v1175 = vld [vmem:[#allocation3 + $0xd8] sm:$0xff]
        %v1176 = vld [vmem:[#allocation3 + $0xe0] sm:$0xff]
        %v1177 = vld [vmem:[#allocation3 + $0xe8] sm:$0xff]
        %v1178 = vld [vmem:[#allocation3 + $0xf0] sm:$0xff]
        %v1179 = vld [vmem:[#allocation3 + $0xf8] sm:$0xff]
        %v1180 = vmul.f32 %v829, %v1148
        %v1181 = vmul.f32 %v831, %v1149
        %v1182 = vmul.f32 %v833, %v1150
        %v1183 = vmul.f32 %v835, %v1151
        %v1184 = vmul.f32 %v837, %v1152
        %v1185 = vmul.f32 %v839, %v1153
        %v1186 = vmul.f32 %v841, %v1154
        %v1187 = vmul.f32 %v843, %v1155
        %v1188 = vmul.f32 %v845, %v1156
        %v1189 = vmul.f32 %v847, %v1157
        %v1190 = vmul.f32 %v849, %v1158
        %v1191 = vmul.f32 %v851, %v1159
        %v1192 = vmul.f32 %v853, %v1160
        %v1193 = vmul.f32 %v855, %v1161
        %v1194 = vmul.f32 %v857, %v1162
        %v1195 = vmul.f32 %v859, %v1163
        %v1196 = vmul.f32 %v861, %v1164
        %v1197 = vmul.f32 %v863, %v1165
        %v1198 = vmul.f32 %v865, %v1166
        %v1199 = vmul.f32 %v867, %v1167
        %v1200 = vmul.f32 %v869, %v1168
        %v1201 = vmul.f32 %v871, %v1169
        %v1202 = vmul.f32 %v873, %v1170
        %v1203 = vmul.f32 %v875, %v1171
        %v1204 = vmul.f32 %v877, %v1172
        %v1205 = vmul.f32 %v879, %v1173
        %v1206 = vmul.f32 %v881, %v1174
        %v1207 = vmul.f32 %v883, %v1175
        %v1208 = vmul.f32 %v885, %v1176
        %v1209 = vmul.f32 %v887, %v1177
        %v1210 = vmul.f32 %v889, %v1178
        %v1211 = vmul.f32 %v891, %v1179
        %1212 = vadd.xlane.f32.xlu0 %v1085
        %v1213 = vpop.xlane.xlu0 %1212
        %1214 = vadd.xlane.f32.xlu0 %v1087
        %v1215 = vpop.xlane.xlu0 %1214
        %1216 = vadd.xlane.f32.xlu0 %v1089
        %v1217 = vpop.xlane.xlu0 %1216
        %1218 = vadd.xlane.f32.xlu0 %v1091
        %v1219 = vpop.xlane.xlu0 %1218
        %1220 = vadd.xlane.f32.xlu0 %v1093
        %v1221 = vpop.xlane.xlu0 %1220
        %1222 = vadd.xlane.f32.xlu0 %v1095
        %v1223 = vpop.xlane.xlu0 %1222
        %1224 = vadd.xlane.f32.xlu0 %v1097
        %v1225 = vpop.xlane.xlu0 %1224
        %1226 = vadd.xlane.f32.xlu0 %v1099
        %v1227 = vpop.xlane.xlu0 %1226
        %1228 = vadd.xlane.f32.xlu0 %v1101
        %v1229 = vpop.xlane.xlu0 %1228
        %1230 = vadd.xlane.f32.xlu0 %v1103
        %v1231 = vpop.xlane.xlu0 %1230
        %1232 = vadd.xlane.f32.xlu0 %v1105
        %v1233 = vpop.xlane.xlu0 %1232
        %1234 = vadd.xlane.f32.xlu0 %v1107
        %v1235 = vpop.xlane.xlu0 %1234
        %1236 = vadd.xlane.f32.xlu0 %v1109
        %v1237 = vpop.xlane.xlu0 %1236
        %1238 = vadd.xlane.f32.xlu0 %v1111
        %v1239 = vpop.xlane.xlu0 %1238
        %1240 = vadd.xlane.f32.xlu0 %v1113
        %v1241 = vpop.xlane.xlu0 %1240
        %1242 = vadd.xlane.f32.xlu0 %v1115
        %v1243 = vpop.xlane.xlu0 %1242
        %1244 = vadd.xlane.f32.xlu0 %v1117
        %v1245 = vpop.xlane.xlu0 %1244
        %1246 = vadd.xlane.f32.xlu0 %v1119
        %v1247 = vpop.xlane.xlu0 %1246
        %1248 = vadd.xlane.f32.xlu0 %v1121
        %v1249 = vpop.xlane.xlu0 %1248
        %1250 = vadd.xlane.f32.xlu0 %v1123
        %v1251 = vpop.xlane.xlu0 %1250
        %1252 = vadd.xlane.f32.xlu0 %v1125
        %v1253 = vpop.xlane.xlu0 %1252
        %1254 = vadd.xlane.f32.xlu0 %v1127
        %v1255 = vpop.xlane.xlu0 %1254
        %1256 = vadd.xlane.f32.xlu0 %v1129
        %v1257 = vpop.xlane.xlu0 %1256
        %1258 = vadd.xlane.f32.xlu0 %v1131
        %v1259 = vpop.xlane.xlu0 %1258
        %1260 = vadd.xlane.f32.xlu0 %v1133
        %v1261 = vpop.xlane.xlu0 %1260
        %1262 = vadd.xlane.f32.xlu0 %v1135
        %v1263 = vpop.xlane.xlu0 %1262
        %1264 = vadd.xlane.f32.xlu0 %v1137
        %v1265 = vpop.xlane.xlu0 %1264
        %1266 = vadd.xlane.f32.xlu0 %v1139
        %v1267 = vpop.xlane.xlu0 %1266
        %1268 = vadd.xlane.f32.xlu0 %v1141
        %v1269 = vpop.xlane.xlu0 %1268
        %1270 = vadd.xlane.f32.xlu0 %v1143
        %v1271 = vpop.xlane.xlu0 %1270
        %1272 = vadd.xlane.f32.xlu0 %v1145
        %v1273 = vpop.xlane.xlu0 %1272
        %1274 = vadd.xlane.f32.xlu0 %v1147
        %v1275 = vpop.xlane.xlu0 %1274
        %v1276 = vadd.f32 %v1180, %v1213
        %v1277 = vadd.f32 %v1181, %v1215
        %v1278 = vadd.f32 %v1182, %v1217
        %v1279 = vadd.f32 %v1183, %v1219
        %v1280 = vadd.f32 %v1184, %v1221
        %v1281 = vadd.f32 %v1185, %v1223
        %v1282 = vadd.f32 %v1186, %v1225
        %v1283 = vadd.f32 %v1187, %v1227
        %v1284 = vadd.f32 %v1188, %v1229
        %v1285 = vadd.f32 %v1189, %v1231
        %v1286 = vadd.f32 %v1190, %v1233
        %v1287 = vadd.f32 %v1191, %v1235
        %v1288 = vadd.f32 %v1192, %v1237
        %v1289 = vadd.f32 %v1193, %v1239
        %v1290 = vadd.f32 %v1194, %v1241
        %v1291 = vadd.f32 %v1195, %v1243
        %v1292 = vadd.f32 %v1196, %v1245
        %v1293 = vadd.f32 %v1197, %v1247
        %v1294 = vadd.f32 %v1198, %v1249
        %v1295 = vadd.f32 %v1199, %v1251
        %v1296 = vadd.f32 %v1200, %v1253
        %v1297 = vadd.f32 %v1201, %v1255
        %v1298 = vadd.f32 %v1202, %v1257
        %v1299 = vadd.f32 %v1203, %v1259
        %v1300 = vadd.f32 %v1204, %v1261
        %v1301 = vadd.f32 %v1205, %v1263
        %v1302 = vadd.f32 %v1206, %v1265
        %v1303 = vadd.f32 %v1207, %v1267
        %v1304 = vadd.f32 %v1208, %v1269
        %v1305 = vadd.f32 %v1209, %v1271
        %v1306 = vadd.f32 %v1210, %v1273
        %v1307 = vadd.f32 %v1211, %v1275
        %vm1308 = vcmask 7168
        %1309 = vst.msk [vmem:[#allocation3] sm:$0xff] %vm1308, %v1276
        %1310 = vst.msk [vmem:[#allocation3 + $0x8] sm:$0xff] %vm1308, %v1277
        %1311 = vst.msk [vmem:[#allocation3 + $0x10] sm:$0xff] %vm1308, %v1278
        %1312 = vst.msk [vmem:[#allocation3 + $0x18] sm:$0xff] %vm1308, %v1279
        %1313 = vst.msk [vmem:[#allocation3 + $0x20] sm:$0xff] %vm1308, %v1280
        %1314 = vst.msk [vmem:[#allocation3 + $0x28] sm:$0xff] %vm1308, %v1281
        %1315 = vst.msk [vmem:[#allocation3 + $0x30] sm:$0xff] %vm1308, %v1282
        %1316 = vst.msk [vmem:[#allocation3 + $0x38] sm:$0xff] %vm1308, %v1283
        %1317 = vst.msk [vmem:[#allocation3 + $0x40] sm:$0xff] %vm1308, %v1284
        %1318 = vst.msk [vmem:[#allocation3 + $0x48] sm:$0xff] %vm1308, %v1285
        %1319 = vst.msk [vmem:[#allocation3 + $0x50] sm:$0xff] %vm1308, %v1286
        %1320 = vst.msk [vmem:[#allocation3 + $0x58] sm:$0xff] %vm1308, %v1287
        %1321 = vst.msk [vmem:[#allocation3 + $0x60] sm:$0xff] %vm1308, %v1288
        %1322 = vst.msk [vmem:[#allocation3 + $0x68] sm:$0xff] %vm1308, %v1289
        %1323 = vst.msk [vmem:[#allocation3 + $0x70] sm:$0xff] %vm1308, %v1290
        %1324 = vst.msk [vmem:[#allocation3 + $0x78] sm:$0xff] %vm1308, %v1291
        %1325 = vst.msk [vmem:[#allocation3 + $0x80] sm:$0xff] %vm1308, %v1292
        %1326 = vst.msk [vmem:[#allocation3 + $0x88] sm:$0xff] %vm1308, %v1293
        %1327 = vst.msk [vmem:[#allocation3 + $0x90] sm:$0xff] %vm1308, %v1294
        %1328 = vst.msk [vmem:[#allocation3 + $0x98] sm:$0xff] %vm1308, %v1295
        %1329 = vst.msk [vmem:[#allocation3 + $0xa0] sm:$0xff] %vm1308, %v1296
        %1330 = vst.msk [vmem:[#allocation3 + $0xa8] sm:$0xff] %vm1308, %v1297
        %1331 = vst.msk [vmem:[#allocation3 + $0xb0] sm:$0xff] %vm1308, %v1298
        %1332 = vst.msk [vmem:[#allocation3 + $0xb8] sm:$0xff] %vm1308, %v1299
        %1333 = vst.msk [vmem:[#allocation3 + $0xc0] sm:$0xff] %vm1308, %v1300
        %1334 = vst.msk [vmem:[#allocation3 + $0xc8] sm:$0xff] %vm1308, %v1301
        %1335 = vst.msk [vmem:[#allocation3 + $0xd0] sm:$0xff] %vm1308, %v1302
        %1336 = vst.msk [vmem:[#allocation3 + $0xd8] sm:$0xff] %vm1308, %v1303
        %1337 = vst.msk [vmem:[#allocation3 + $0xe0] sm:$0xff] %vm1308, %v1304
        %1338 = vst.msk [vmem:[#allocation3 + $0xe8] sm:$0xff] %vm1308, %v1305
        %1339 = vst.msk [vmem:[#allocation3 + $0xf0] sm:$0xff] %vm1308, %v1306
        %1340 = vst.msk [vmem:[#allocation3 + $0xf8] sm:$0xff] %vm1308, %v1307
        %1341 = vmatpush.msra.mxu0 %v554
        %1342 = vmatpush.msra.mxu0 %v553
        %1343 = vmatpush.msra.mxu0 %v552
        %1344 = vmatpush.msra.mxu0 %v551
        %1345 = vmatpush.msra.mxu0 %v550
        %1346 = vmatpush.msra.mxu0 %v549
        %1347 = vmatpush.msra.mxu0 %v548
        %1348 = vmatpush.msra.mxu0 %v547
        %1349 = vmatpush.msra.mxu0 %v546
        %1350 = vmatpush.msra.mxu0 %v545
        %1351 = vmatpush.msra.mxu0 %v544
        %1352 = vmatpush.msra.mxu0 %v543
        %1353 = vmatpush.msra.mxu0 %v542
        %1354 = vmatpush.msra.mxu0 %v541
        %1355 = vmatpush.msra.mxu0 %v540
        %1356 = vmatpush.msra.mxu0 %v539
        %1357 = vmatmul.f32.gmra.mxu0 %v1085
        %v1358 = vpop.f32.mrf.mxu0
        %v1359 = vadd.f32 0.0, %v1358
        %1360 = vmatmul.f32.gmra.mxu0 %v1087
        %v1361 = vpop.f32.mrf.mxu0
        %v1362 = vadd.f32 0.0, %v1361
        %1363 = vmatmul.f32.gmra.mxu0 %v1089
        %v1364 = vpop.f32.mrf.mxu0
        %v1365 = vadd.f32 0.0, %v1364
        %1366 = vmatmul.f32.gmra.mxu0 %v1091
        %v1367 = vpop.f32.mrf.mxu0
        %v1368 = vadd.f32 0.0, %v1367
        %1369 = vmatmul.f32.gmra.mxu0 %v1093
        %v1370 = vpop.f32.mrf.mxu0
        %v1371 = vadd.f32 0.0, %v1370
        %1372 = vmatmul.f32.gmra.mxu0 %v1095
        %v1373 = vpop.f32.mrf.mxu0
        %v1374 = vadd.f32 0.0, %v1373
        %1375 = vmatmul.f32.gmra.mxu0 %v1097
        %v1376 = vpop.f32.mrf.mxu0
        %v1377 = vadd.f32 0.0, %v1376
        %1378 = vmatmul.f32.gmra.mxu0 %v1099
        %v1379 = vpop.f32.mrf.mxu0
        %v1380 = vadd.f32 0.0, %v1379
        %1381 = vmatmul.f32.gmra.mxu0 %v1101
        %v1382 = vpop.f32.mrf.mxu0
        %v1383 = vadd.f32 0.0, %v1382
        %1384 = vmatmul.f32.gmra.mxu0 %v1103
        %v1385 = vpop.f32.mrf.mxu0
        %v1386 = vadd.f32 0.0, %v1385
        %1387 = vmatmul.f32.gmra.mxu0 %v1105
        %v1388 = vpop.f32.mrf.mxu0
        %v1389 = vadd.f32 0.0, %v1388
        %1390 = vmatmul.f32.gmra.mxu0 %v1107
        %v1391 = vpop.f32.mrf.mxu0
        %v1392 = vadd.f32 0.0, %v1391
        %1393 = vmatmul.f32.gmra.mxu0 %v1109
        %v1394 = vpop.f32.mrf.mxu0
        %v1395 = vadd.f32 0.0, %v1394
        %1396 = vmatmul.f32.gmra.mxu0 %v1111
        %v1397 = vpop.f32.mrf.mxu0
        %v1398 = vadd.f32 0.0, %v1397
        %1399 = vmatmul.f32.gmra.mxu0 %v1113
        %v1400 = vpop.f32.mrf.mxu0
        %v1401 = vadd.f32 0.0, %v1400
        %1402 = vmatmul.f32.gmra.mxu0 %v1115
        %v1403 = vpop.f32.mrf.mxu0
        %v1404 = vadd.f32 0.0, %v1403
        %1405 = vmatmul.f32.gmra.mxu0 %v1117
        %v1406 = vpop.f32.mrf.mxu0
        %v1407 = vadd.f32 0.0, %v1406
        %1408 = vmatmul.f32.gmra.mxu0 %v1119
        %v1409 = vpop.f32.mrf.mxu0
        %v1410 = vadd.f32 0.0, %v1409
        %1411 = vmatmul.f32.gmra.mxu0 %v1121
        %v1412 = vpop.f32.mrf.mxu0
        %v1413 = vadd.f32 0.0, %v1412
        %1414 = vmatmul.f32.gmra.mxu0 %v1123
        %v1415 = vpop.f32.mrf.mxu0
        %v1416 = vadd.f32 0.0, %v1415
        %1417 = vmatmul.f32.gmra.mxu0 %v1125
        %v1418 = vpop.f32.mrf.mxu0
        %v1419 = vadd.f32 0.0, %v1418
        %1420 = vmatmul.f32.gmra.mxu0 %v1127
        %v1421 = vpop.f32.mrf.mxu0
        %v1422 = vadd.f32 0.0, %v1421
        %1423 = vmatmul.f32.gmra.mxu0 %v1129
        %v1424 = vpop.f32.mrf.mxu0
        %v1425 = vadd.f32 0.0, %v1424
        %1426 = vmatmul.f32.gmra.mxu0 %v1131
        %v1427 = vpop.f32.mrf.mxu0
        %v1428 = vadd.f32 0.0, %v1427
        %1429 = vmatmul.f32.gmra.mxu0 %v1133
        %v1430 = vpop.f32.mrf.mxu0
        %v1431 = vadd.f32 0.0, %v1430
        %1432 = vmatmul.f32.gmra.mxu0 %v1135
        %v1433 = vpop.f32.mrf.mxu0
        %v1434 = vadd.f32 0.0, %v1433
        %1435 = vmatmul.f32.gmra.mxu0 %v1137
        %v1436 = vpop.f32.mrf.mxu0
        %v1437 = vadd.f32 0.0, %v1436
        %1438 = vmatmul.f32.gmra.mxu0 %v1139
        %v1439 = vpop.f32.mrf.mxu0
        %v1440 = vadd.f32 0.0, %v1439
        %1441 = vmatmul.f32.gmra.mxu0 %v1141
        %v1442 = vpop.f32.mrf.mxu0
        %v1443 = vadd.f32 0.0, %v1442
        %1444 = vmatmul.f32.gmra.mxu0 %v1143
        %v1445 = vpop.f32.mrf.mxu0
        %v1446 = vadd.f32 0.0, %v1445
        %1447 = vmatmul.f32.gmra.mxu0 %v1145
        %v1448 = vpop.f32.mrf.mxu0
        %v1449 = vadd.f32 0.0, %v1448
        %1450 = vmatmul.f32.gmra.mxu0 %v1147
        %v1451 = vpop.f32.mrf.mxu0
        %v1452 = vadd.f32 0.0, %v1451
        %1453 = vdwg.mxu0
        %v1454 = vld [vmem:[#allocation4] sm:$0xff]
        %v1455 = vld [vmem:[#allocation4 + $0x8] sm:$0xff]
        %v1456 = vld [vmem:[#allocation4 + $0x10] sm:$0xff]
        %v1457 = vld [vmem:[#allocation4 + $0x18] sm:$0xff]
        %v1458 = vld [vmem:[#allocation4 + $0x20] sm:$0xff]
        %v1459 = vld [vmem:[#allocation4 + $0x28] sm:$0xff]
        %v1460 = vld [vmem:[#allocation4 + $0x30] sm:$0xff]
        %v1461 = vld [vmem:[#allocation4 + $0x38] sm:$0xff]
        %v1462 = vld [vmem:[#allocation4 + $0x40] sm:$0xff]
        %v1463 = vld [vmem:[#allocation4 + $0x48] sm:$0xff]
        %v1464 = vld [vmem:[#allocation4 + $0x50] sm:$0xff]
        %v1465 = vld [vmem:[#allocation4 + $0x58] sm:$0xff]
        %v1466 = vld [vmem:[#allocation4 + $0x60] sm:$0xff]
        %v1467 = vld [vmem:[#allocation4 + $0x68] sm:$0xff]
        %v1468 = vld [vmem:[#allocation4 + $0x70] sm:$0xff]
        %v1469 = vld [vmem:[#allocation4 + $0x78] sm:$0xff]
        %v1470 = vld [vmem:[#allocation4 + $0x80] sm:$0xff]
        %v1471 = vld [vmem:[#allocation4 + $0x88] sm:$0xff]
        %v1472 = vld [vmem:[#allocation4 + $0x90] sm:$0xff]
        %v1473 = vld [vmem:[#allocation4 + $0x98] sm:$0xff]
        %v1474 = vld [vmem:[#allocation4 + $0xa0] sm:$0xff]
        %v1475 = vld [vmem:[#allocation4 + $0xa8] sm:$0xff]
        %v1476 = vld [vmem:[#allocation4 + $0xb0] sm:$0xff]
        %v1477 = vld [vmem:[#allocation4 + $0xb8] sm:$0xff]
        %v1478 = vld [vmem:[#allocation4 + $0xc0] sm:$0xff]
        %v1479 = vld [vmem:[#allocation4 + $0xc8] sm:$0xff]
        %v1480 = vld [vmem:[#allocation4 + $0xd0] sm:$0xff]
        %v1481 = vld [vmem:[#allocation4 + $0xd8] sm:$0xff]
        %v1482 = vld [vmem:[#allocation4 + $0xe0] sm:$0xff]
        %v1483 = vld [vmem:[#allocation4 + $0xe8] sm:$0xff]
        %v1484 = vld [vmem:[#allocation4 + $0xf0] sm:$0xff]
        %v1485 = vld [vmem:[#allocation4 + $0xf8] sm:$0xff]
        %1487 = vset.pattern.permute.xlu0 0
        %1488 = vperm.xlu0 %1487, %v829
        %v1489 = vpop.permute.xlu0 %1488
        %1492 = vset.pattern.permute.xlu0 0
        %1493 = vperm.xlu0 %1492, %v831
        %v1494 = vpop.permute.xlu0 %1493
        %1497 = vset.pattern.permute.xlu0 0
        %1498 = vperm.xlu0 %1497, %v833
        %v1499 = vpop.permute.xlu0 %1498
        %1502 = vset.pattern.permute.xlu0 0
        %1503 = vperm.xlu0 %1502, %v835
        %v1504 = vpop.permute.xlu0 %1503
        %1507 = vset.pattern.permute.xlu0 0
        %1508 = vperm.xlu0 %1507, %v837
        %v1509 = vpop.permute.xlu0 %1508
        %1512 = vset.pattern.permute.xlu0 0
        %1513 = vperm.xlu0 %1512, %v839
        %v1514 = vpop.permute.xlu0 %1513
        %1517 = vset.pattern.permute.xlu0 0
        %1518 = vperm.xlu0 %1517, %v841
        %v1519 = vpop.permute.xlu0 %1518
        %1522 = vset.pattern.permute.xlu0 0
        %1523 = vperm.xlu0 %1522, %v843
        %v1524 = vpop.permute.xlu0 %1523
        %1527 = vset.pattern.permute.xlu0 0
        %1528 = vperm.xlu0 %1527, %v845
        %v1529 = vpop.permute.xlu0 %1528
        %1532 = vset.pattern.permute.xlu0 0
        %1533 = vperm.xlu0 %1532, %v847
        %v1534 = vpop.permute.xlu0 %1533
        %1537 = vset.pattern.permute.xlu0 0
        %1538 = vperm.xlu0 %1537, %v849
        %v1539 = vpop.permute.xlu0 %1538
        %1542 = vset.pattern.permute.xlu0 0
        %1543 = vperm.xlu0 %1542, %v851
        %v1544 = vpop.permute.xlu0 %1543
        %1547 = vset.pattern.permute.xlu0 0
        %1548 = vperm.xlu0 %1547, %v853
        %v1549 = vpop.permute.xlu0 %1548
        %1552 = vset.pattern.permute.xlu0 0
        %1553 = vperm.xlu0 %1552, %v855
        %v1554 = vpop.permute.xlu0 %1553
        %1557 = vset.pattern.permute.xlu0 0
        %1558 = vperm.xlu0 %1557, %v857
        %v1559 = vpop.permute.xlu0 %1558
        %1562 = vset.pattern.permute.xlu0 0
        %1563 = vperm.xlu0 %1562, %v859
        %v1564 = vpop.permute.xlu0 %1563
        %1567 = vset.pattern.permute.xlu0 0
        %1568 = vperm.xlu0 %1567, %v861
        %v1569 = vpop.permute.xlu0 %1568
        %1572 = vset.pattern.permute.xlu0 0
        %1573 = vperm.xlu0 %1572, %v863
        %v1574 = vpop.permute.xlu0 %1573
        %1577 = vset.pattern.permute.xlu0 0
        %1578 = vperm.xlu0 %1577, %v865
        %v1579 = vpop.permute.xlu0 %1578
        %1582 = vset.pattern.permute.xlu0 0
        %1583 = vperm.xlu0 %1582, %v867
        %v1584 = vpop.permute.xlu0 %1583
        %1587 = vset.pattern.permute.xlu0 0
        %1588 = vperm.xlu0 %1587, %v869
        %v1589 = vpop.permute.xlu0 %1588
        %1592 = vset.pattern.permute.xlu0 0
        %1593 = vperm.xlu0 %1592, %v871
        %v1594 = vpop.permute.xlu0 %1593
        %1597 = vset.pattern.permute.xlu0 0
        %1598 = vperm.xlu0 %1597, %v873
        %v1599 = vpop.permute.xlu0 %1598
        %1602 = vset.pattern.permute.xlu0 0
        %1603 = vperm.xlu0 %1602, %v875
        %v1604 = vpop.permute.xlu0 %1603
        %1607 = vset.pattern.permute.xlu0 0
        %1608 = vperm.xlu0 %1607, %v877
        %v1609 = vpop.permute.xlu0 %1608
        %1612 = vset.pattern.permute.xlu0 0
        %1613 = vperm.xlu0 %1612, %v879
        %v1614 = vpop.permute.xlu0 %1613
        %1617 = vset.pattern.permute.xlu0 0
        %1618 = vperm.xlu0 %1617, %v881
        %v1619 = vpop.permute.xlu0 %1618
        %1622 = vset.pattern.permute.xlu0 0
        %1623 = vperm.xlu0 %1622, %v883
        %v1624 = vpop.permute.xlu0 %1623
        %1627 = vset.pattern.permute.xlu0 0
        %1628 = vperm.xlu0 %1627, %v885
        %v1629 = vpop.permute.xlu0 %1628
        %1632 = vset.pattern.permute.xlu0 0
        %1633 = vperm.xlu0 %1632, %v887
        %v1634 = vpop.permute.xlu0 %1633
        %1637 = vset.pattern.permute.xlu0 0
        %1638 = vperm.xlu0 %1637, %v889
        %v1639 = vpop.permute.xlu0 %1638
        %1642 = vset.pattern.permute.xlu0 0
        %1643 = vperm.xlu0 %1642, %v891
        %v1644 = vpop.permute.xlu0 %1643
        %v1646 = vmul.f32 %v1489, %v1454
        %v1647 = vmul.f32 %v1494, %v1455
        %v1648 = vmul.f32 %v1499, %v1456
        %v1649 = vmul.f32 %v1504, %v1457
        %v1650 = vmul.f32 %v1509, %v1458
        %v1651 = vmul.f32 %v1514, %v1459
        %v1652 = vmul.f32 %v1519, %v1460
        %v1653 = vmul.f32 %v1524, %v1461
        %v1654 = vmul.f32 %v1529, %v1462
        %v1655 = vmul.f32 %v1534, %v1463
        %v1656 = vmul.f32 %v1539, %v1464
        %v1657 = vmul.f32 %v1544, %v1465
        %v1658 = vmul.f32 %v1549, %v1466
        %v1659 = vmul.f32 %v1554, %v1467
        %v1660 = vmul.f32 %v1559, %v1468
        %v1661 = vmul.f32 %v1564, %v1469
        %v1662 = vmul.f32 %v1569, %v1470
        %v1663 = vmul.f32 %v1574, %v1471
        %v1664 = vmul.f32 %v1579, %v1472
        %v1665 = vmul.f32 %v1584, %v1473
        %v1666 = vmul.f32 %v1589, %v1474
        %v1667 = vmul.f32 %v1594, %v1475
        %v1668 = vmul.f32 %v1599, %v1476
        %v1669 = vmul.f32 %v1604, %v1477
        %v1670 = vmul.f32 %v1609, %v1478
        %v1671 = vmul.f32 %v1614, %v1479
        %v1672 = vmul.f32 %v1619, %v1480
        %v1673 = vmul.f32 %v1624, %v1481
        %v1674 = vmul.f32 %v1629, %v1482
        %v1675 = vmul.f32 %v1634, %v1483
        %v1676 = vmul.f32 %v1639, %v1484
        %v1677 = vmul.f32 %v1644, %v1485
        %v1678 = vadd.f32 %v1646, %v1359
        %v1679 = vadd.f32 %v1647, %v1362
        %v1680 = vadd.f32 %v1648, %v1365
        %v1681 = vadd.f32 %v1649, %v1368
        %v1682 = vadd.f32 %v1650, %v1371
        %v1683 = vadd.f32 %v1651, %v1374
        %v1684 = vadd.f32 %v1652, %v1377
        %v1685 = vadd.f32 %v1653, %v1380
        %v1686 = vadd.f32 %v1654, %v1383
        %v1687 = vadd.f32 %v1655, %v1386
        %v1688 = vadd.f32 %v1656, %v1389
        %v1689 = vadd.f32 %v1657, %v1392
        %v1690 = vadd.f32 %v1658, %v1395
        %v1691 = vadd.f32 %v1659, %v1398
        %v1692 = vadd.f32 %v1660, %v1401
        %v1693 = vadd.f32 %v1661, %v1404
        %v1694 = vadd.f32 %v1662, %v1407
        %v1695 = vadd.f32 %v1663, %v1410
        %v1696 = vadd.f32 %v1664, %v1413
        %v1697 = vadd.f32 %v1665, %v1416
        %v1698 = vadd.f32 %v1666, %v1419
        %v1699 = vadd.f32 %v1667, %v1422
        %v1700 = vadd.f32 %v1668, %v1425
        %v1701 = vadd.f32 %v1669, %v1428
        %v1702 = vadd.f32 %v1670, %v1431
        %v1703 = vadd.f32 %v1671, %v1434
        %v1704 = vadd.f32 %v1672, %v1437
        %v1705 = vadd.f32 %v1673, %v1440
        %v1706 = vadd.f32 %v1674, %v1443
        %v1707 = vadd.f32 %v1675, %v1446
        %v1708 = vadd.f32 %v1676, %v1449
        %v1709 = vadd.f32 %v1677, %v1452
        %1710 = vst [vmem:[#allocation4] sm:$0xff] %v1678
        %1711 = vst [vmem:[#allocation4 + $0x8] sm:$0xff] %v1679
        %1712 = vst [vmem:[#allocation4 + $0x10] sm:$0xff] %v1680
        %1713 = vst [vmem:[#allocation4 + $0x18] sm:$0xff] %v1681
        %1714 = vst [vmem:[#allocation4 + $0x20] sm:$0xff] %v1682
        %1715 = vst [vmem:[#allocation4 + $0x28] sm:$0xff] %v1683
        %1716 = vst [vmem:[#allocation4 + $0x30] sm:$0xff] %v1684
        %1717 = vst [vmem:[#allocation4 + $0x38] sm:$0xff] %v1685
        %1718 = vst [vmem:[#allocation4 + $0x40] sm:$0xff] %v1686
        %1719 = vst [vmem:[#allocation4 + $0x48] sm:$0xff] %v1687
        %1720 = vst [vmem:[#allocation4 + $0x50] sm:$0xff] %v1688
        %1721 = vst [vmem:[#allocation4 + $0x58] sm:$0xff] %v1689
        %1722 = vst [vmem:[#allocation4 + $0x60] sm:$0xff] %v1690
        %1723 = vst [vmem:[#allocation4 + $0x68] sm:$0xff] %v1691
        %1724 = vst [vmem:[#allocation4 + $0x70] sm:$0xff] %v1692
        %1725 = vst [vmem:[#allocation4 + $0x78] sm:$0xff] %v1693
        %1726 = vst [vmem:[#allocation4 + $0x80] sm:$0xff] %v1694
        %1727 = vst [vmem:[#allocation4 + $0x88] sm:$0xff] %v1695
        %1728 = vst [vmem:[#allocation4 + $0x90] sm:$0xff] %v1696
        %1729 = vst [vmem:[#allocation4 + $0x98] sm:$0xff] %v1697
        %1730 = vst [vmem:[#allocation4 + $0xa0] sm:$0xff] %v1698
        %1731 = vst [vmem:[#allocation4 + $0xa8] sm:$0xff] %v1699
        %1732 = vst [vmem:[#allocation4 + $0xb0] sm:$0xff] %v1700
        %1733 = vst [vmem:[#allocation4 + $0xb8] sm:$0xff] %v1701
        %1734 = vst [vmem:[#allocation4 + $0xc0] sm:$0xff] %v1702
        %1735 = vst [vmem:[#allocation4 + $0xc8] sm:$0xff] %v1703
        %1736 = vst [vmem:[#allocation4 + $0xd0] sm:$0xff] %v1704
        %1737 = vst [vmem:[#allocation4 + $0xd8] sm:$0xff] %v1705
        %1738 = vst [vmem:[#allocation4 + $0xe0] sm:$0xff] %v1706
        %1739 = vst [vmem:[#allocation4 + $0xe8] sm:$0xff] %v1707
        %1740 = vst [vmem:[#allocation4 + $0xf0] sm:$0xff] %v1708
        %1741 = vst [vmem:[#allocation4 + $0xf8] sm:$0xff] %v1709
        %1742 = vst.msk [vmem:[#allocation2] sm:$0xff] %vm1308, %v764
        %1743 = vst.msk [vmem:[#allocation2 + $0x8] sm:$0xff] %vm1308, %v765
        %1744 = vst.msk [vmem:[#allocation2 + $0x10] sm:$0xff] %vm1308, %v766
        %1745 = vst.msk [vmem:[#allocation2 + $0x18] sm:$0xff] %vm1308, %v767
        %1746 = vst.msk [vmem:[#allocation2 + $0x20] sm:$0xff] %vm1308, %v768
        %1747 = vst.msk [vmem:[#allocation2 + $0x28] sm:$0xff] %vm1308, %v769
        %1748 = vst.msk [vmem:[#allocation2 + $0x30] sm:$0xff] %vm1308, %v770
        %1749 = vst.msk [vmem:[#allocation2 + $0x38] sm:$0xff] %vm1308, %v771
        %1750 = vst.msk [vmem:[#allocation2 + $0x40] sm:$0xff] %vm1308, %v772
        %1751 = vst.msk [vmem:[#allocation2 + $0x48] sm:$0xff] %vm1308, %v773
        %1752 = vst.msk [vmem:[#allocation2 + $0x50] sm:$0xff] %vm1308, %v774
        %1753 = vst.msk [vmem:[#allocation2 + $0x58] sm:$0xff] %vm1308, %v775
        %1754 = vst.msk [vmem:[#allocation2 + $0x60] sm:$0xff] %vm1308, %v776
        %1755 = vst.msk [vmem:[#allocation2 + $0x68] sm:$0xff] %vm1308, %v777
        %1756 = vst.msk [vmem:[#allocation2 + $0x70] sm:$0xff] %vm1308, %v778
        %1757 = vst.msk [vmem:[#allocation2 + $0x78] sm:$0xff] %vm1308, %v779
        %1758 = vst.msk [vmem:[#allocation2 + $0x80] sm:$0xff] %vm1308, %v780
        %1759 = vst.msk [vmem:[#allocation2 + $0x88] sm:$0xff] %vm1308, %v781
        %1760 = vst.msk [vmem:[#allocation2 + $0x90] sm:$0xff] %vm1308, %v782
        %1761 = vst.msk [vmem:[#allocation2 + $0x98] sm:$0xff] %vm1308, %v783
        %1762 = vst.msk [vmem:[#allocation2 + $0xa0] sm:$0xff] %vm1308, %v784
        %1763 = vst.msk [vmem:[#allocation2 + $0xa8] sm:$0xff] %vm1308, %v785
        %1764 = vst.msk [vmem:[#allocation2 + $0xb0] sm:$0xff] %vm1308, %v786
        %1765 = vst.msk [vmem:[#allocation2 + $0xb8] sm:$0xff] %vm1308, %v787
        %1766 = vst.msk [vmem:[#allocation2 + $0xc0] sm:$0xff] %vm1308, %v788
        %1767 = vst.msk [vmem:[#allocation2 + $0xc8] sm:$0xff] %vm1308, %v789
        %1768 = vst.msk [vmem:[#allocation2 + $0xd0] sm:$0xff] %vm1308, %v790
        %1769 = vst.msk [vmem:[#allocation2 + $0xd8] sm:$0xff] %vm1308, %v791
        %1770 = vst.msk [vmem:[#allocation2 + $0xe0] sm:$0xff] %vm1308, %v792
        %1771 = vst.msk [vmem:[#allocation2 + $0xe8] sm:$0xff] %vm1308, %v793
        %1772 = vst.msk [vmem:[#allocation2 + $0xf0] sm:$0xff] %vm1308, %v794
        %1773 = vst.msk [vmem:[#allocation2 + $0xf8] sm:$0xff] %vm1308, %v795
        %p1774 = scmp.eq.s32.totalorder %s32, 1
        // Predicated region
        $region49: #{tpu_custom_call.1} parent=31 // pred_check
          %p1775 = pneg %p1774
        $region50: #{tpu_custom_call.1} parent=31 // pred_check_branch
          %1777 = sbr.rel (%p1775) target = $region52
        $region51: #{tpu_custom_call.1} parent=31 // pred_region
          %v1778 = vld [vmem:[#allocation3] sm:$0xff]
          %v1779 = vld [vmem:[#allocation3 + $0x8] sm:$0xff]
          %v1780 = vld [vmem:[#allocation3 + $0x10] sm:$0xff]
          %v1781 = vld [vmem:[#allocation3 + $0x18] sm:$0xff]
          %v1782 = vld [vmem:[#allocation3 + $0x20] sm:$0xff]
          %v1783 = vld [vmem:[#allocation3 + $0x28] sm:$0xff]
          %v1784 = vld [vmem:[#allocation3 + $0x30] sm:$0xff]
          %v1785 = vld [vmem:[#allocation3 + $0x38] sm:$0xff]
          %v1786 = vld [vmem:[#allocation3 + $0x40] sm:$0xff]
          %v1787 = vld [vmem:[#allocation3 + $0x48] sm:$0xff]
          %v1788 = vld [vmem:[#allocation3 + $0x50] sm:$0xff]
          %v1789 = vld [vmem:[#allocation3 + $0x58] sm:$0xff]
          %v1790 = vld [vmem:[#allocation3 + $0x60] sm:$0xff]
          %v1791 = vld [vmem:[#allocation3 + $0x68] sm:$0xff]
          %v1792 = vld [vmem:[#allocation3 + $0x70] sm:$0xff]
          %v1793 = vld [vmem:[#allocation3 + $0x78] sm:$0xff]
          %v1794 = vld [vmem:[#allocation3 + $0x80] sm:$0xff]
          %v1795 = vld [vmem:[#allocation3 + $0x88] sm:$0xff]
          %v1796 = vld [vmem:[#allocation3 + $0x90] sm:$0xff]
          %v1797 = vld [vmem:[#allocation3 + $0x98] sm:$0xff]
          %v1798 = vld [vmem:[#allocation3 + $0xa0] sm:$0xff]
          %v1799 = vld [vmem:[#allocation3 + $0xa8] sm:$0xff]
          %v1800 = vld [vmem:[#allocation3 + $0xb0] sm:$0xff]
          %v1801 = vld [vmem:[#allocation3 + $0xb8] sm:$0xff]
          %v1802 = vld [vmem:[#allocation3 + $0xc0] sm:$0xff]
          %v1803 = vld [vmem:[#allocation3 + $0xc8] sm:$0xff]
          %v1804 = vld [vmem:[#allocation3 + $0xd0] sm:$0xff]
          %v1805 = vld [vmem:[#allocation3 + $0xd8] sm:$0xff]
          %v1806 = vld [vmem:[#allocation3 + $0xe0] sm:$0xff]
          %v1807 = vld [vmem:[#allocation3 + $0xe8] sm:$0xff]
          %v1808 = vld [vmem:[#allocation3 + $0xf0] sm:$0xff]
          %v1809 = vld [vmem:[#allocation3 + $0xf8] sm:$0xff]
          %v1810 = vrcp.pop %v1778
          %v1811 = vrcp.pop %v1779
          %v1812 = vrcp.pop %v1780
          %v1813 = vrcp.pop %v1781
          %v1814 = vrcp.pop %v1782
          %v1815 = vrcp.pop %v1783
          %v1816 = vrcp.pop %v1784
          %v1817 = vrcp.pop %v1785
          %v1818 = vrcp.pop %v1786
          %v1819 = vrcp.pop %v1787
          %v1820 = vrcp.pop %v1788
          %v1821 = vrcp.pop %v1789
          %v1822 = vrcp.pop %v1790
          %v1823 = vrcp.pop %v1791
          %v1824 = vrcp.pop %v1792
          %v1825 = vrcp.pop %v1793
          %v1826 = vrcp.pop %v1794
          %v1827 = vrcp.pop %v1795
          %v1828 = vrcp.pop %v1796
          %v1829 = vrcp.pop %v1797
          %v1830 = vrcp.pop %v1798
          %v1831 = vrcp.pop %v1799
          %v1832 = vrcp.pop %v1800
          %v1833 = vrcp.pop %v1801
          %v1834 = vrcp.pop %v1802
          %v1835 = vrcp.pop %v1803
          %v1836 = vrcp.pop %v1804
          %v1837 = vrcp.pop %v1805
          %v1838 = vrcp.pop %v1806
          %v1839 = vrcp.pop %v1807
          %v1840 = vrcp.pop %v1808
          %v1841 = vrcp.pop %v1809
          %v1842 = vld [vmem:[#allocation4] sm:$0xff]
          %v1843 = vld [vmem:[#allocation4 + $0x8] sm:$0xff]
          %v1844 = vld [vmem:[#allocation4 + $0x10] sm:$0xff]
          %v1845 = vld [vmem:[#allocation4 + $0x18] sm:$0xff]
          %v1846 = vld [vmem:[#allocation4 + $0x20] sm:$0xff]
          %v1847 = vld [vmem:[#allocation4 + $0x28] sm:$0xff]
          %v1848 = vld [vmem:[#allocation4 + $0x30] sm:$0xff]
          %v1849 = vld [vmem:[#allocation4 + $0x38] sm:$0xff]
          %v1850 = vld [vmem:[#allocation4 + $0x40] sm:$0xff]
          %v1851 = vld [vmem:[#allocation4 + $0x48] sm:$0xff]
          %v1852 = vld [vmem:[#allocation4 + $0x50] sm:$0xff]
          %v1853 = vld [vmem:[#allocation4 + $0x58] sm:$0xff]
          %v1854 = vld [vmem:[#allocation4 + $0x60] sm:$0xff]
          %v1855 = vld [vmem:[#allocation4 + $0x68] sm:$0xff]
          %v1856 = vld [vmem:[#allocation4 + $0x70] sm:$0xff]
          %v1857 = vld [vmem:[#allocation4 + $0x78] sm:$0xff]
          %v1858 = vld [vmem:[#allocation4 + $0x80] sm:$0xff]
          %v1859 = vld [vmem:[#allocation4 + $0x88] sm:$0xff]
          %v1860 = vld [vmem:[#allocation4 + $0x90] sm:$0xff]
          %v1861 = vld [vmem:[#allocation4 + $0x98] sm:$0xff]
          %v1862 = vld [vmem:[#allocation4 + $0xa0] sm:$0xff]
          %v1863 = vld [vmem:[#allocation4 + $0xa8] sm:$0xff]
          %v1864 = vld [vmem:[#allocation4 + $0xb0] sm:$0xff]
          %v1865 = vld [vmem:[#allocation4 + $0xb8] sm:$0xff]
          %v1866 = vld [vmem:[#allocation4 + $0xc0] sm:$0xff]
          %v1867 = vld [vmem:[#allocation4 + $0xc8] sm:$0xff]
          %v1868 = vld [vmem:[#allocation4 + $0xd0] sm:$0xff]
          %v1869 = vld [vmem:[#allocation4 + $0xd8] sm:$0xff]
          %v1870 = vld [vmem:[#allocation4 + $0xe0] sm:$0xff]
          %v1871 = vld [vmem:[#allocation4 + $0xe8] sm:$0xff]
          %v1872 = vld [vmem:[#allocation4 + $0xf0] sm:$0xff]
          %v1873 = vld [vmem:[#allocation4 + $0xf8] sm:$0xff]
          %1875 = vset.pattern.permute.xlu0 0
          %1876 = vperm.xlu0 %1875, %v1810
          %v1877 = vpop.permute.xlu0 %1876
          %1880 = vset.pattern.permute.xlu0 0
          %1881 = vperm.xlu0 %1880, %v1811
          %v1882 = vpop.permute.xlu0 %1881
          %1885 = vset.pattern.permute.xlu0 0
          %1886 = vperm.xlu0 %1885, %v1812
          %v1887 = vpop.permute.xlu0 %1886
          %1890 = vset.pattern.permute.xlu0 0
          %1891 = vperm.xlu0 %1890, %v1813
          %v1892 = vpop.permute.xlu0 %1891
          %1895 = vset.pattern.permute.xlu0 0
          %1896 = vperm.xlu0 %1895, %v1814
          %v1897 = vpop.permute.xlu0 %1896
          %1900 = vset.pattern.permute.xlu0 0
          %1901 = vperm.xlu0 %1900, %v1815
          %v1902 = vpop.permute.xlu0 %1901
          %1905 = vset.pattern.permute.xlu0 0
          %1906 = vperm.xlu0 %1905, %v1816
          %v1907 = vpop.permute.xlu0 %1906
          %1910 = vset.pattern.permute.xlu0 0
          %1911 = vperm.xlu0 %1910, %v1817
          %v1912 = vpop.permute.xlu0 %1911
          %1915 = vset.pattern.permute.xlu0 0
          %1916 = vperm.xlu0 %1915, %v1818
          %v1917 = vpop.permute.xlu0 %1916
          %1920 = vset.pattern.permute.xlu0 0
          %1921 = vperm.xlu0 %1920, %v1819
          %v1922 = vpop.permute.xlu0 %1921
          %1925 = vset.pattern.permute.xlu0 0
          %1926 = vperm.xlu0 %1925, %v1820
          %v1927 = vpop.permute.xlu0 %1926
          %1930 = vset.pattern.permute.xlu0 0
          %1931 = vperm.xlu0 %1930, %v1821
          %v1932 = vpop.permute.xlu0 %1931
          %1935 = vset.pattern.permute.xlu0 0
          %1936 = vperm.xlu0 %1935, %v1822
          %v1937 = vpop.permute.xlu0 %1936
          %1940 = vset.pattern.permute.xlu0 0
          %1941 = vperm.xlu0 %1940, %v1823
          %v1942 = vpop.permute.xlu0 %1941
          %1945 = vset.pattern.permute.xlu0 0
          %1946 = vperm.xlu0 %1945, %v1824
          %v1947 = vpop.permute.xlu0 %1946
          %1950 = vset.pattern.permute.xlu0 0
          %1951 = vperm.xlu0 %1950, %v1825
          %v1952 = vpop.permute.xlu0 %1951
          %1955 = vset.pattern.permute.xlu0 0
          %1956 = vperm.xlu0 %1955, %v1826
          %v1957 = vpop.permute.xlu0 %1956
          %1960 = vset.pattern.permute.xlu0 0
          %1961 = vperm.xlu0 %1960, %v1827
          %v1962 = vpop.permute.xlu0 %1961
          %1965 = vset.pattern.permute.xlu0 0
          %1966 = vperm.xlu0 %1965, %v1828
          %v1967 = vpop.permute.xlu0 %1966
          %1970 = vset.pattern.permute.xlu0 0
          %1971 = vperm.xlu0 %1970, %v1829
          %v1972 = vpop.permute.xlu0 %1971
          %1975 = vset.pattern.permute.xlu0 0
          %1976 = vperm.xlu0 %1975, %v1830
          %v1977 = vpop.permute.xlu0 %1976
          %1980 = vset.pattern.permute.xlu0 0
          %1981 = vperm.xlu0 %1980, %v1831
          %v1982 = vpop.permute.xlu0 %1981
          %1985 = vset.pattern.permute.xlu0 0
          %1986 = vperm.xlu0 %1985, %v1832
          %v1987 = vpop.permute.xlu0 %1986
          %1990 = vset.pattern.permute.xlu0 0
          %1991 = vperm.xlu0 %1990, %v1833
          %v1992 = vpop.permute.xlu0 %1991
          %1995 = vset.pattern.permute.xlu0 0
          %1996 = vperm.xlu0 %1995, %v1834
          %v1997 = vpop.permute.xlu0 %1996
          %2000 = vset.pattern.permute.xlu0 0
          %2001 = vperm.xlu0 %2000, %v1835
          %v2002 = vpop.permute.xlu0 %2001
          %2005 = vset.pattern.permute.xlu0 0
          %2006 = vperm.xlu0 %2005, %v1836
          %v2007 = vpop.permute.xlu0 %2006
          %2010 = vset.pattern.permute.xlu0 0
          %2011 = vperm.xlu0 %2010, %v1837
          %v2012 = vpop.permute.xlu0 %2011
          %2015 = vset.pattern.permute.xlu0 0
          %2016 = vperm.xlu0 %2015, %v1838
          %v2017 = vpop.permute.xlu0 %2016
          %2020 = vset.pattern.permute.xlu0 0
          %2021 = vperm.xlu0 %2020, %v1839
          %v2022 = vpop.permute.xlu0 %2021
          %2025 = vset.pattern.permute.xlu0 0
          %2026 = vperm.xlu0 %2025, %v1840
          %v2027 = vpop.permute.xlu0 %2026
          %2030 = vset.pattern.permute.xlu0 0
          %2031 = vperm.xlu0 %2030, %v1841
          %v2032 = vpop.permute.xlu0 %2031
          %v2034 = vmul.f32 %v1842, %v1877
          %v2035 = vmul.f32 %v1843, %v1882
          %v2036 = vmul.f32 %v1844, %v1887
          %v2037 = vmul.f32 %v1845, %v1892
          %v2038 = vmul.f32 %v1846, %v1897
          %v2039 = vmul.f32 %v1847, %v1902
          %v2040 = vmul.f32 %v1848, %v1907
          %v2041 = vmul.f32 %v1849, %v1912
          %v2042 = vmul.f32 %v1850, %v1917
          %v2043 = vmul.f32 %v1851, %v1922
          %v2044 = vmul.f32 %v1852, %v1927
          %v2045 = vmul.f32 %v1853, %v1932
          %v2046 = vmul.f32 %v1854, %v1937
          %v2047 = vmul.f32 %v1855, %v1942
          %v2048 = vmul.f32 %v1856, %v1947
          %v2049 = vmul.f32 %v1857, %v1952
          %v2050 = vmul.f32 %v1858, %v1957
          %v2051 = vmul.f32 %v1859, %v1962
          %v2052 = vmul.f32 %v1860, %v1967
          %v2053 = vmul.f32 %v1861, %v1972
          %v2054 = vmul.f32 %v1862, %v1977
          %v2055 = vmul.f32 %v1863, %v1982
          %v2056 = vmul.f32 %v1864, %v1987
          %v2057 = vmul.f32 %v1865, %v1992
          %v2058 = vmul.f32 %v1866, %v1997
          %v2059 = vmul.f32 %v1867, %v2002
          %v2060 = vmul.f32 %v1868, %v2007
          %v2061 = vmul.f32 %v1869, %v2012
          %v2062 = vmul.f32 %v1870, %v2017
          %v2063 = vmul.f32 %v1871, %v2022
          %v2064 = vmul.f32 %v1872, %v2027
          %v2065 = vmul.f32 %v1873, %v2032
          %2066 = vst [vmem:[%s351] sm:$0xff] %v2034
          %2067 = vst [vmem:[%s351 + $0x8] sm:$0xff] %v2035
          %2068 = vst [vmem:[%s351 + $0x10] sm:$0xff] %v2036
          %2069 = vst [vmem:[%s351 + $0x18] sm:$0xff] %v2037
          %2070 = vst [vmem:[%s351 + $0x20] sm:$0xff] %v2038
          %2071 = vst [vmem:[%s351 + $0x28] sm:$0xff] %v2039
          %2072 = vst [vmem:[%s351 + $0x30] sm:$0xff] %v2040
          %2073 = vst [vmem:[%s351 + $0x38] sm:$0xff] %v2041
          %2074 = vst [vmem:[%s351 + $0x40] sm:$0xff] %v2042
          %2075 = vst [vmem:[%s351 + $0x48] sm:$0xff] %v2043
          %2076 = vst [vmem:[%s351 + $0x50] sm:$0xff] %v2044
          %2077 = vst [vmem:[%s351 + $0x58] sm:$0xff] %v2045
          %2078 = vst [vmem:[%s351 + $0x60] sm:$0xff] %v2046
          %2079 = vst [vmem:[%s351 + $0x68] sm:$0xff] %v2047
          %2080 = vst [vmem:[%s351 + $0x70] sm:$0xff] %v2048
          %2081 = vst [vmem:[%s351 + $0x78] sm:$0xff] %v2049
          %2082 = vst [vmem:[%s351 + $0x80] sm:$0xff] %v2050
          %2083 = vst [vmem:[%s351 + $0x88] sm:$0xff] %v2051
          %2084 = vst [vmem:[%s351 + $0x90] sm:$0xff] %v2052
          %2085 = vst [vmem:[%s351 + $0x98] sm:$0xff] %v2053
          %2086 = vst [vmem:[%s351 + $0xa0] sm:$0xff] %v2054
          %2087 = vst [vmem:[%s351 + $0xa8] sm:$0xff] %v2055
          %2088 = vst [vmem:[%s351 + $0xb0] sm:$0xff] %v2056
          %2089 = vst [vmem:[%s351 + $0xb8] sm:$0xff] %v2057
          %2090 = vst [vmem:[%s351 + $0xc0] sm:$0xff] %v2058
          %2091 = vst [vmem:[%s351 + $0xc8] sm:$0xff] %v2059
          %2092 = vst [vmem:[%s351 + $0xd0] sm:$0xff] %v2060
          %2093 = vst [vmem:[%s351 + $0xd8] sm:$0xff] %v2061
          %2094 = vst [vmem:[%s351 + $0xe0] sm:$0xff] %v2062
          %2095 = vst [vmem:[%s351 + $0xe8] sm:$0xff] %v2063
          %2096 = vst [vmem:[%s351 + $0xf0] sm:$0xff] %v2064
          %2097 = vst [vmem:[%s351 + $0xf8] sm:$0xff] %v2065
        $region52: #{tpu_custom_call.1} parent=31 // pred_fallthru
          _
        %s2098 = sand.u32 %s151, 1
        %s2099 = scalar_lea.sflag [#allocation7], %s2098
        %s2100 = sand.u32 %s151, 1
        %s2101 = smul.addr %s2100, 256
        %s2102 = scalar_lea.vmem [#allocation11], %s2101
        // Predicated region
        $region53: #{tpu_custom_call.1} parent=31 // pred_check
          %p2103 = pneg %p161
        $region54: #{tpu_custom_call.1} parent=31 // pred_check_branch
          %2105 = sbr.rel (%p2103) target = $region56
        $region55: #{tpu_custom_call.1} parent=31 // pred_region
          #allocation15 [shape = 'u32[6]{0}', space=smem, size = 0x18, scoped, tag = 'DMA stride descriptor']
          %s2106 = smul.u32 2, %s30
          %s2107 = smul.u32 16, %s31
          %2109 = vsyncadd %s2099, 0
          %s2110 = smul.addr %s2106, 32
          %s2111 = sadd.s32 %s2107, %s2110
          %s2112 = smul.addr %s29, 128
          %s2113 = sadd.s32 %s2111, %s2112
          %s2114 = smul.addr %s2113, 8
          %s2115 = scalar_lea.hbm %s3, %s2114
          %s2117 = sshll.u32 1, 14
          %s2118 = sxor.u32 4294967295, %s2117
          %s2121 = sshll.u32 7, 18
          %s2122 = sxor.u32 4294967295, %s2121
          %s2123 = sand.u32 0, %s2122
          %s2125 = sor.u32 %s2123, 0
          %s2126 = sshll.u32 %s2102, 4
          %s2127 = int_to_ptr.vmem [resolvable:$true] %s2126
          %s2128 = sshll.u32 %s2115, 4
          %s2129 = int_to_ptr.hbm [resolvable:$true] %s2128
          %2135 = sst [smem:[#allocation15]] 2048
          %s2136 = scalar_lea.smem [#allocation15], 1
          %2137 = sst [smem:[%s2136]] 4096
          %s2138 = scalar_lea.smem [#allocation15], 2
          %2139 = sst [smem:[%s2138]] 16
          %s2140 = scalar_lea.smem [#allocation15], 3
          %2141 = sst [smem:[%s2140]] 128
          %s2142 = scalar_lea.smem [#allocation15], 4
          %2143 = sst [smem:[%s2142]] 128
          %s2144 = scalar_lea.smem [#allocation15], 5
          %2145 = sst [smem:[%s2144]] 8
          %2147 = dma.general %s2127, 4096, %s2129, %s2099, [#allocation14], [#allocation15], %s2125, 0
        $region56: #{tpu_custom_call.1} parent=31 // pred_fallthru
          _
      $region32: #{tpu_custom_call.1} parent=5 // pred_fallthru
        _
      %p2148 = scmp.le.s32.totalorder 2, %s18
      // Predicated region
      $region57: #{tpu_custom_call.1} parent=5 // pred_check
        %p2149 = pneg %p2148
      $region58: #{tpu_custom_call.1} parent=5 // pred_check_branch
        %2151 = sbr.rel (%p2149) target = $region60
      $region59: #{tpu_custom_call.1} parent=5 // pred_region
        %s2152 = ssub.s32 %s18, 2
        // Predicated region
        $region61: #{tpu_custom_call.1} parent=59 // pred_check
          %p2153 = pneg %p167
        $region62: #{tpu_custom_call.1} parent=59 // pred_check_branch
          %2155 = sbr.rel (%p2153) target = $region64
        $region63: #{tpu_custom_call.1} parent=59 // pred_region
          %s2156 = sand.u32 %s152, 1
          %s2157 = scalar_lea.sflag [#allocation7], %s2156
          %s2158 = sand.u32 %s152, 1
          %s2159 = smul.addr %s2158, 256
          %s2160 = scalar_lea.vmem [#allocation11], %s2159
          %2162 = dma.done %s2157, 4096
        $region64: #{tpu_custom_call.1} parent=59 // pred_fallthru
          _
      $region60: #{tpu_custom_call.1} parent=5 // pred_fallthru
        _
    $region6: #{tpu_custom_call.1} parent=1 // loop_footer
      %s22 = sadd.s32 1, %s18
    $region7: #{tpu_custom_call.1} parent=1 // loop_footer_branch
      %17 = sbr.rel target = $region3
    $region8: #{tpu_custom_call.1} parent=1 // loop_exit
      _
    %2163 = vsyncpa [#allocation6], 1
    %s2164 = scalar_lea.sflag [#allocation6], 1
    %2165 = vsyncpa %s2164, 1
    %2166 = vsyncpa [#allocation9], 1
    %s2167 = scalar_lea.sflag [#allocation9], 1
    %2168 = vsyncpa %s2167, 1
    %2169 = vsyncpa [#allocation7], 1
    %s2170 = scalar_lea.sflag [#allocation7], 1
    %2171 = vsyncpa %s2170, 1

</llo_original>
